<compile_context>
chip_gen: v5e
topology: v5e:2x2
jax: 0.10.0
libtpu: 0.0.40
codegen_flags: <defaults>
</compile_context>

<pallas_src>
import functools

import jax
import jax.numpy as jnp
from jax import lax
from jax.experimental import pallas as pl
from jax.experimental.pallas import tpu as pltpu


# ----------------------------------------------------------------------------
# helpers
# ----------------------------------------------------------------------------
def _pick_tile(n, cap=512, mult=16):
    """Largest tile <= cap that divides n; full extent if n is already small."""
    if n <= cap:
        return n
    for t in range(cap, 0, -1):
        if n % t == 0 and t % mult == 0:
            return t
    return n


# ----------------------------------------------------------------------------
# Pallas kernels
# ----------------------------------------------------------------------------
def _encoder_kernel(lens_ref, x_ref, spk_ref,
                    wssl_ref, bssl_ref, wfuse_ref, bfuse_ref,
                    wfeat_ref, wspk_ref, bspk_ref, o_ref, *, tile_t):
    """Fused: [avhubert|raven|vatlm] stub projections (relu + padding mask)
    -> fuse_layer -> spk_emb_layer, all in one MXU pass chain."""
    b = pl.program_id(0)
    t_blk = pl.program_id(1)

    x = x_ref[0]                                             # (tile_t, frame_dim) bf16
    h = jnp.dot(x, wssl_ref[...], preferred_element_type=jnp.float32)
    h = jnp.maximum(h + bssl_ref[...], 0.0)                  # fused SSL branches

    # padding_mask = arange(T) > lip_len  => frame is valid iff t <= lip_len[b]
    length = lens_ref[b]
    t_idx = t_blk * tile_t + lax.broadcasted_iota(jnp.int32, (tile_t, 1), 0)
    h = h * (t_idx <= length).astype(jnp.float32)

    # fuse_layer
    h = jnp.dot(h.astype(jnp.bfloat16), wfuse_ref[...],
                preferred_element_type=jnp.float32) + bfuse_ref[...]

    # spk_emb_layer: cat([feat, spk]) @ W == feat @ W_feat + spk @ W_spk
    spk = spk_ref[0]                                         # (1, spk_dim) bf16
    spk_term = jnp.dot(spk, wspk_ref[...], preferred_element_type=jnp.float32)
    out = jnp.dot(h.astype(jnp.bfloat16), wfeat_ref[...],
                  preferred_element_type=jnp.float32) + spk_term + bspk_ref[...]
    o_ref[0] = out.astype(o_ref.dtype)


def _conv3_kernel(xp_ref, w_ref, b_ref, o_ref, *, t_len, relu):
    """1-D conv, kernel=3, 'same' padding: three accumulating dots over a
    once-padded (t_len+2) time window.  No im2col materialization."""
    x_prev = xp_ref[0, 0:t_len, :]
    x_cur = xp_ref[0, 1:t_len + 1, :]
    x_next = xp_ref[0, 2:t_len + 2, :]
    acc = jnp.dot(x_prev, w_ref[0], preferred_element_type=jnp.float32)
    acc = acc + jnp.dot(x_cur, w_ref[1], preferred_element_type=jnp.float32)
    acc = acc + jnp.dot(x_next, w_ref[2], preferred_element_type=jnp.float32)
    acc = acc + b_ref[...]
    if relu:
        acc = jnp.maximum(acc, 0.0)
    o_ref[0] = acc.astype(o_ref.dtype)


def _heads_kernel(h_ref, wpc_ref, bpc_ref, wh_ref, bh_ref, wrc_ref, brc_ref,
                  pc_ref, rc_ref, *, prj_dim):
    """Fused: [dec_prj | dec_cluster] heads, then HuBERTDecoder
    (hidden relu + [reg | cls]) chained on the prj slice, h read once."""
    h = h_ref[...]                                           # (tile_m, Ch) bf16
    pc = jnp.dot(h, wpc_ref[...], preferred_element_type=jnp.float32) + bpc_ref[...]
    pc_ref[...] = pc.astype(pc_ref.dtype)

    prj = pc[:, 0:prj_dim].astype(jnp.bfloat16)
    hd = jnp.maximum(
        jnp.dot(prj, wh_ref[...], preferred_element_type=jnp.float32) + bh_ref[...],
        0.0)
    rc = jnp.dot(hd.astype(jnp.bfloat16), wrc_ref[...],
                 preferred_element_type=jnp.float32) + brc_ref[...]
    rc_ref[...] = rc.astype(rc_ref.dtype)


# ----------------------------------------------------------------------------
# kernel wrappers
# ----------------------------------------------------------------------------
def encoder_forward(params, frames, spk_emb, lip_len):
    """frames: (B, T, frame_dim) bf16 -> feat (B, T, hidden) bf16."""
    B, T, F = frames.shape
    dsum = params["w_ssl"].shape[-1]
    hidden = params["b_spk"].shape[-1]
    spk3 = spk_emb.reshape(B, 1, -1).astype(jnp.bfloat16)
    spk_dim = spk3.shape[-1]
    tile_t = _pick_tile(T)
    n_t = T // tile_t

    grid_spec = pltpu.PrefetchScalarGridSpec(
        num_scalar_prefetch=1,                 # lip_len -> SMEM, used for the mask
        grid=(B, n_t),
        in_specs=[
            pl.BlockSpec((1, tile_t, F), lambda b, t, lens: (b, t, 0)),
            pl.BlockSpec((1, 1, spk_dim), lambda b, t, lens: (b, 0, 0)),
            pl.BlockSpec((F, dsum), lambda b, t, lens: (0, 0)),
            pl.BlockSpec((1, dsum), lambda b, t, lens: (0, 0)),
            pl.BlockSpec((dsum, hidden), lambda b, t, lens: (0, 0)),
            pl.BlockSpec((1, hidden), lambda b, t, lens: (0, 0)),
            pl.BlockSpec((hidden, hidden), lambda b, t, lens: (0, 0)),
            pl.BlockSpec((spk_dim, hidden), lambda b, t, lens: (0, 0)),
            pl.BlockSpec((1, hidden), lambda b, t, lens: (0, 0)),
        ],
        out_specs=pl.BlockSpec((1, tile_t, hidden), lambda b, t, lens: (b, t, 0)),
    )
    return pl.pallas_call(
        functools.partial(_encoder_kernel, tile_t=tile_t),
        out_shape=jax.ShapeDtypeStruct((B, T, hidden), jnp.bfloat16),
        grid_spec=grid_spec,
        compiler_params=pltpu.CompilerParams(
            dimension_semantics=("parallel", "parallel")),
    )(lip_len.astype(jnp.int32), frames, spk3,
      params["w_ssl"], params["b_ssl"], params["w_fuse"], params["b_fuse"],
      params["w_feat"], params["w_spk"], params["b_spk"])


def conv1d_same_k3(x_btc, w3, b, *, relu, out_dtype):
    """x_btc: (B, T, Cin); w3: (3, Cin, Cout) as [w(t-1), w(t), w(t+1)]."""
    B, T, Cin = x_btc.shape
    Cout = w3.shape[-1]
    xp = jnp.pad(x_btc, ((0, 0), (1, 1), (0, 0)))            # single +2-row halo pad
    return pl.pallas_call(
        functools.partial(_conv3_kernel, t_len=T, relu=relu),
        out_shape=jax.ShapeDtypeStruct((B, T, Cout), out_dtype),
        grid=(B,),
        in_specs=[
            pl.BlockSpec((1, T + 2, Cin), lambda i: (i, 0, 0)),
            pl.BlockSpec((3, Cin, Cout), lambda i: (0, 0, 0)),
            pl.BlockSpec((1, Cout), lambda i: (0, 0)),
        ],
        out_specs=pl.BlockSpec((1, T, Cout), lambda i: (i, 0, 0)),
        compiler_params=pltpu.CompilerParams(dimension_semantics=("parallel",)),
    )(xp, w3, b)


def heads_forward(params, h_flat, prj_dim):
    """h_flat: (M, conv_hidden) bf16 -> (pc=(M, prj+ncls), rc=(M, enc+ncls)) fp32."""
    M, Ch = h_flat.shape
    n_pc = params["w_pc"].shape[-1]
    n_rc = params["w_rc"].shape[-1]
    hdh = params["w_h"].shape[-1]
    tile_m = _pick_tile(M)

    return pl.pallas_call(
        functools.partial(_heads_kernel, prj_dim=prj_dim),
        out_shape=(jax.ShapeDtypeStruct((M, n_pc), jnp.float32),
                   jax.ShapeDtypeStruct((M, n_rc), jnp.float32)),
        grid=(M // tile_m,),
        in_specs=[
            pl.BlockSpec((tile_m, Ch), lambda i: (i, 0)),
            pl.BlockSpec((Ch, n_pc), lambda i: (0, 0)),
            pl.BlockSpec((1, n_pc), lambda i: (0, 0)),
            pl.BlockSpec((prj_dim, hdh), lambda i: (0, 0)),
            pl.BlockSpec((1, hdh), lambda i: (0, 0)),
            pl.BlockSpec((hdh, n_rc), lambda i: (0, 0)),
            pl.BlockSpec((1, n_rc), lambda i: (0, 0)),
        ],
        out_specs=(pl.BlockSpec((tile_m, n_pc), lambda i: (i, 0)),
                   pl.BlockSpec((tile_m, n_rc), lambda i: (i, 0))),
        compiler_params=pltpu.CompilerParams(dimension_semantics=("parallel",)),
    )(h_flat, params["w_pc"], params["b_pc"], params["w_h"], params["b_h"],
      params["w_rc"], params["b_rc"])


# ----------------------------------------------------------------------------
# Parameter construction (deterministic, synthetic; weights bf16, biases fp32)
# ----------------------------------------------------------------------------
def _init_linear(key, fan_in, fan_out):
    kw, kb = jax.random.split(key)
    w = (jax.random.normal(kw, (fan_in, fan_out), jnp.float32)
         / jnp.sqrt(jnp.float32(fan_in)))
    b = 0.01 * jax.random.normal(kb, (1, fan_out), jnp.float32)
    return w.astype(jnp.bfloat16), b


def make_params(key, *, frame_dim, av_dim, rv_dim, vt_dim, hidden, spk_dim,
                conv_hidden, mel_dim, prj_dim, n_clusters, hdec_hidden,
                enc_out_dim):
    keys = jax.random.split(key, 9)
    p = {}
    dsum = av_dim + rv_dim + vt_dim
    # TODO(synk): AV-HuBERT / RAVEn / VATLM pretrained transformer backbones have
    # no clean Pallas equivalent; each branch is stubbed as a masked linear
    # projection of the flattened per-frame lip crop, fused into one weight slab.
    p["w_ssl"], p["b_ssl"] = _init_linear(keys[0], frame_dim, dsum)
    p["w_fuse"], p["b_fuse"] = _init_linear(keys[1], dsum, hidden)
    # spk_emb_layer, split by input rows: [feat rows | spk rows]
    p["w_feat"], p["b_spk"] = _init_linear(keys[2], hidden, hidden)
    p["w_spk"], _ = _init_linear(keys[3], spk_dim, hidden)
    # ConvDecoderHuBERT
    wc1, p["b_conv1"] = _init_linear(keys[4], 3 * hidden, conv_hidden)       # k=3
    p["w_conv1"] = wc1.reshape(3, hidden, conv_hidden)
    wm, p["b_mel"] = _init_linear(keys[5], 3 * conv_hidden, mel_dim)         # k=3
    p["w_mel"] = wm.reshape(3, conv_hidden, mel_dim)
    p["w_pc"], p["b_pc"] = _init_linear(keys[6], conv_hidden,
                                        prj_dim + n_clusters)                # fused k=1 heads
    # HuBERTDecoder (hidden + fused reg|cls head)
    p["w_h"], p["b_h"] = _init_linear(keys[7], prj_dim, hdec_hidden)
    p["w_rc"], p["b_rc"] = _init_linear(keys[8], hdec_hidden,
                                        enc_out_dim + n_clusters)
    return p


# ----------------------------------------------------------------------------
# Forward pass (mirrors BaseHuBERTModel.forward, ssl_type='ensemble',
# use_spk_emb=True, eval mode so dropout is the identity)
# ----------------------------------------------------------------------------
def base_hubert_forward(params, lip, lip_len, spk_emb, *, prj_dim, enc_out_dim):
    """
    lip:     (B, C, H, W, T)   -- same convention as the PyTorch module
    lip_len: (B,) int32
    spk_emb: (B, spk_dim)
    returns (conv_output_mel, conv_output_hubert_prj,
             conv_output_hubert_cluster, hubert_output_reg, hubert_output_cls)
    """
    B, C, H, W, T = lip.shape
    # (B,C,H,W,T) -> (B,C,T,H,W) -> (B,T,C,H,W) -> flatten per-frame
    frames = jnp.transpose(lip, (0, 4, 1, 2, 3)).reshape(B, T, C * H * W)
    frames = frames.astype(jnp.bfloat16)

    # SSL branches (stub) + fuse_layer + spk_emb_layer, all fused
    feat = encoder_forward(params, frames, spk_emb, lip_len)     # (B, T, hidden) bf16

    # --- ConvDecoderHuBERT ---
    h = conv1d_same_k3(feat, params["w_conv1"], params["b_conv1"],
                       relu=True, out_dtype=jnp.bfloat16)        # (B, T, Ch)
    mel = conv1d_same_k3(h, params["w_mel"], params["b_mel"],
                         relu=False, out_dtype=jnp.float32)      # (B, T, mel)

    # fused prj|cluster heads + HuBERTDecoder
    pc, rc = heads_forward(params, h.reshape(B * T, -1), prj_dim)

    prj = pc[:, :prj_dim].reshape(B, T, prj_dim)
    cluster = pc[:, prj_dim:].reshape(B, T, -1)
    hubert_output_reg = rc[:, :enc_out_dim].reshape(B, T, enc_out_dim)
    hubert_output_cls = rc[:, enc_out_dim:].reshape(B, T, -1)

    # module contract: conv outputs are (B, C, T); transpose in the XLA wrapper
    conv_output_mel = jnp.transpose(mel, (0, 2, 1))
    conv_output_hubert_prj = jnp.transpose(prj, (0, 2, 1))
    conv_output_hubert_cluster = jnp.transpose(cluster, (0, 2, 1))

    return (conv_output_mel, conv_output_hubert_prj, conv_output_hubert_cluster,
            hubert_output_reg, hubert_output_cls)


# ----------------------------------------------------------------------------
if __name__ == "__main__":
    key = jax.random.PRNGKey(0)
    k_lip, k_spk, k_param = jax.random.split(key, 3)

    # small synthetic shapes
    B, C, H, W, T = 2, 1, 16, 16, 8
    av_dim, rv_dim, vt_dim = 32, 24, 16
    hidden = 32
    spk_dim = 16
    conv_hidden = 48
    mel_dim = 20
    prj_dim = 32          # == encoder_output_dim fed to HuBERTDecoder
    n_clusters = 16
    hdec_hidden = 64
    enc_out_dim = 32

    lip = jax.random.normal(k_lip, (B, C, H, W, T), jnp.float32)
    lip_len = jnp.array([T, 5], dtype=jnp.int32)
    spk_emb = jax.random.normal(k_spk, (B, spk_dim), jnp.float32)

    params = make_params(
        k_param,
        frame_dim=C * H * W, av_dim=av_dim, rv_dim=rv_dim, vt_dim=vt_dim,
        hidden=hidden, spk_dim=spk_dim, conv_hidden=conv_hidden,
        mel_dim=mel_dim, prj_dim=prj_dim, n_clusters=n_clusters,
        hdec_hidden=hdec_hidden, enc_out_dim=enc_out_dim,
    )

    fwd = jax.jit(functools.partial(base_hubert_forward,
                                    prj_dim=prj_dim, enc_out_dim=enc_out_dim))
    outs = fwd(params, lip, lip_len, spk_emb)
    outs = jax.block_until_ready(outs)

    expected_shapes = [
        (B, mel_dim, T),        # conv_output_mel
        (B, prj_dim, T),        # conv_output_hubert_prj
        (B, n_clusters, T),     # conv_output_hubert_cluster
        (B, T, enc_out_dim),    # hubert_output_reg
        (B, T, n_clusters),     # hubert_output_cls
    ]
    for o, s in zip(outs, expected_shapes):
        assert o.shape == s, (o.shape, s)
        assert bool(jnp.all(jnp.isfinite(o.astype(jnp.float32))))

    print("KERNEL_OK")
</pallas_src>

<mosaic_0001>
module attributes {stable_mosaic.version = 11 : i64} {
  func.func @_encoder_kernel(%arg0: i32, %arg1: i32, %arg2: memref<2xi32, #tpu.memory_space<smem>>, %arg3: memref<1x8x256xbf16, #tpu.memory_space<vmem>>, %arg4: memref<1x1x16xbf16, #tpu.memory_space<vmem>>, %arg5: memref<256x72xbf16, #tpu.memory_space<vmem>>, %arg6: memref<1x72xf32, #tpu.memory_space<vmem>>, %arg7: memref<72x32xbf16, #tpu.memory_space<vmem>>, %arg8: memref<1x32xf32, #tpu.memory_space<vmem>>, %arg9: memref<32x32xbf16, #tpu.memory_space<vmem>>, %arg10: memref<16x32xbf16, #tpu.memory_space<vmem>>, %arg11: memref<1x32xf32, #tpu.memory_space<vmem>>, %arg12: memref<1x8x32xbf16, #tpu.memory_space<vmem>>) attributes {dimension_semantics = [#tpu.dimension_semantics<parallel>, #tpu.dimension_semantics<parallel>], iteration_bounds = array<i64: 2, 1>, scalar_prefetch = 1 : i64, scratch_operands = 0 : i64, tpu.core_type = #tpu.core_type<tc>, window_params = [{transform_indices = @transform_0, window_bounds = array<i64: 1, 8, 256>}, {transform_indices = @transform_1, window_bounds = array<i64: 1, 1, 16>}, {pipeline_mode = #tpu.pipeline_mode<synchronous>, transform_indices = @transform_2, window_bounds = array<i64: 256, 72>}, {pipeline_mode = #tpu.pipeline_mode<synchronous>, transform_indices = @transform_3, window_bounds = array<i64: 1, 72>}, {pipeline_mode = #tpu.pipeline_mode<synchronous>, transform_indices = @transform_4, window_bounds = array<i64: 72, 32>}, {pipeline_mode = #tpu.pipeline_mode<synchronous>, transform_indices = @transform_5, window_bounds = array<i64: 1, 32>}, {pipeline_mode = #tpu.pipeline_mode<synchronous>, transform_indices = @transform_6, window_bounds = array<i64: 32, 32>}, {pipeline_mode = #tpu.pipeline_mode<synchronous>, transform_indices = @transform_7, window_bounds = array<i64: 16, 32>}, {pipeline_mode = #tpu.pipeline_mode<synchronous>, transform_indices = @transform_8, window_bounds = array<i64: 1, 32>}, {transform_indices = @transform_9, window_bounds = array<i64: 1, 8, 32>}]} {
    %c0 = arith.constant 0 : index
    %c0_0 = arith.constant 0 : index
    %c0_1 = arith.constant 0 : index
    %0 = vector.load %arg3[%c0, %c0_0, %c0_1] : memref<1x8x256xbf16, #tpu.memory_space<vmem>>, vector<1x8x256xbf16>
    %1 = vector.shape_cast %0 : vector<1x8x256xbf16> to vector<8x256xbf16>
    %c0_2 = arith.constant 0 : index
    %c0_3 = arith.constant 0 : index
    %2 = vector.load %arg5[%c0_2, %c0_3] : memref<256x72xbf16, #tpu.memory_space<vmem>>, vector<256x72xbf16>
    %cst = arith.constant dense<0.000000e+00> : vector<8x72xf32>
    %3 = tpu.matmul %1, %2, %cst {dimension_numbers = #tpu.dot_dimension_numbers<[1], [0], [0], [1], [0, 0, 1, 1], [], []>} : vector<8x256xbf16>, vector<256x72xbf16>, vector<8x72xf32> -> vector<8x72xf32>
    %c0_4 = arith.constant 0 : index
    %c0_5 = arith.constant 0 : index
    %4 = vector.load %arg6[%c0_4, %c0_5] : memref<1x72xf32, #tpu.memory_space<vmem>>, vector<1x72xf32>
    %5 = vector.broadcast %4 : vector<1x72xf32> to vector<8x72xf32>
    %6 = arith.addf %3, %5 : vector<8x72xf32>
    %cst_6 = arith.constant 0.000000e+00 : f32
    %7 = vector.broadcast %cst_6 : f32 to vector<8x72xf32>
    %8 = arith.maximumf %6, %7 : vector<8x72xf32>
    %9 = arith.index_cast %arg0 : i32 to index
    %10 = memref.load %arg2[%9] : memref<2xi32, #tpu.memory_space<smem>>
    %c8_i32 = arith.constant 8 : i32
    %11 = arith.muli %arg1, %c8_i32 : i32
    %12 = tpu.iota {dimensions = array<i32: 0>} : vector<8x1xi32>
    %13 = vector.broadcast %11 : i32 to vector<8x1xi32>
    %14 = arith.addi %13, %12 : vector<8x1xi32>
    %15 = vector.broadcast %10 : i32 to vector<8x1xi32>
    %16 = arith.cmpi sle, %14, %15 : vector<8x1xi32>
    %17 = arith.extui %16 : vector<8x1xi1> to vector<8x1xi32>
    %18 = arith.sitofp %17 : vector<8x1xi32> to vector<8x1xf32>
    %19 = vector.broadcast %18 : vector<8x1xf32> to vector<8x72xf32>
    %20 = arith.mulf %8, %19 : vector<8x72xf32>
    %21 = arith.truncf %20 : vector<8x72xf32> to vector<8x72xbf16>
    %c0_7 = arith.constant 0 : index
    %c0_8 = arith.constant 0 : index
    %22 = vector.load %arg7[%c0_7, %c0_8] : memref<72x32xbf16, #tpu.memory_space<vmem>>, vector<72x32xbf16>
    %cst_9 = arith.constant dense<0.000000e+00> : vector<8x32xf32>
    %23 = tpu.matmul %21, %22, %cst_9 {dimension_numbers = #tpu.dot_dimension_numbers<[1], [0], [0], [1], [0, 0, 1, 1], [], []>} : vector<8x72xbf16>, vector<72x32xbf16>, vector<8x32xf32> -> vector<8x32xf32>
    %c0_10 = arith.constant 0 : index
    %c0_11 = arith.constant 0 : index
    %24 = vector.load %arg8[%c0_10, %c0_11] : memref<1x32xf32, #tpu.memory_space<vmem>>, vector<1x32xf32>
    %25 = vector.broadcast %24 : vector<1x32xf32> to vector<8x32xf32>
    %26 = arith.addf %23, %25 : vector<8x32xf32>
    %c0_12 = arith.constant 0 : index
    %c0_13 = arith.constant 0 : index
    %c0_14 = arith.constant 0 : index
    %27 = vector.load %arg4[%c0_12, %c0_13, %c0_14] : memref<1x1x16xbf16, #tpu.memory_space<vmem>>, vector<1x1x16xbf16>
    %28 = vector.shape_cast %27 : vector<1x1x16xbf16> to vector<1x16xbf16>
    %c0_15 = arith.constant 0 : index
    %c0_16 = arith.constant 0 : index
    %29 = vector.load %arg10[%c0_15, %c0_16] : memref<16x32xbf16, #tpu.memory_space<vmem>>, vector<16x32xbf16>
    %cst_17 = arith.constant dense<0.000000e+00> : vector<1x32xf32>
    %30 = tpu.matmul %28, %29, %cst_17 {dimension_numbers = #tpu.dot_dimension_numbers<[1], [0], [0], [1], [0, 0, 1, 1], [], []>} : vector<1x16xbf16>, vector<16x32xbf16>, vector<1x32xf32> -> vector<1x32xf32>
    %31 = arith.truncf %26 : vector<8x32xf32> to vector<8x32xbf16>
    %c0_18 = arith.constant 0 : index
    %c0_19 = arith.constant 0 : index
    %32 = vector.load %arg9[%c0_18, %c0_19] : memref<32x32xbf16, #tpu.memory_space<vmem>>, vector<32x32xbf16>
    %cst_20 = arith.constant dense<0.000000e+00> : vector<8x32xf32>
    %33 = tpu.matmul %31, %32, %cst_20 {dimension_numbers = #tpu.dot_dimension_numbers<[1], [0], [0], [1], [0, 0, 1, 1], [], []>} : vector<8x32xbf16>, vector<32x32xbf16>, vector<8x32xf32> -> vector<8x32xf32>
    %34 = vector.broadcast %30 : vector<1x32xf32> to vector<8x32xf32>
    %35 = arith.addf %33, %34 : vector<8x32xf32>
    %c0_21 = arith.constant 0 : index
    %c0_22 = arith.constant 0 : index
    %36 = vector.load %arg11[%c0_21, %c0_22] : memref<1x32xf32, #tpu.memory_space<vmem>>, vector<1x32xf32>
    %37 = vector.broadcast %36 : vector<1x32xf32> to vector<8x32xf32>
    %38 = arith.addf %35, %37 : vector<8x32xf32>
    %39 = arith.truncf %38 : vector<8x32xf32> to vector<8x32xbf16>
    %c0_23 = arith.constant 0 : index
    %c0_24 = arith.constant 0 : index
    %c0_25 = arith.constant 0 : index
    %40 = vector.load %arg12[%c0_23, %c0_24, %c0_25] : memref<1x8x32xbf16, #tpu.memory_space<vmem>>, vector<1x8x32xbf16>
    %41 = vector.shape_cast %40 : vector<1x8x32xbf16> to vector<8x32xbf16>
    %42 = vector.shape_cast %39 : vector<8x32xbf16> to vector<1x8x32xbf16>
    tpu.vector_store %arg12[%c0_23, %c0_24, %c0_25], %42 {strides = array<i32>} : memref<1x8x32xbf16, #tpu.memory_space<vmem>>, vector<1x8x32xbf16>,
    return
  }
  func.func @transform_0(%arg0: i32, %arg1: i32, %arg2: memref<2xi32, #tpu.memory_space<smem>>) -> (i32, i32, i32) {
    %c0_i32 = arith.constant 0 : i32
    %c0_i32_0 = arith.constant 0 : i32
    return %arg0, %arg1, %c0_i32 : i32, i32, i32
  }
  func.func @transform_1(%arg0: i32, %arg1: i32, %arg2: memref<2xi32, #tpu.memory_space<smem>>) -> (i32, i32, i32) {
    %c0_i32 = arith.constant 0 : i32
    %c0_i32_0 = arith.constant 0 : i32
    %c0_i32_1 = arith.constant 0 : i32
    return %arg0, %c0_i32, %c0_i32_0 : i32, i32, i32
  }
  func.func @transform_2(%arg0: i32, %arg1: i32, %arg2: memref<2xi32, #tpu.memory_space<smem>>) -> (i32, i32) {
    %c0_i32 = arith.constant 0 : i32
    %c0_i32_0 = arith.constant 0 : i32
    %c0_i32_1 = arith.constant 0 : i32
    return %c0_i32, %c0_i32_0 : i32, i32
  }
  func.func @transform_3(%arg0: i32, %arg1: i32, %arg2: memref<2xi32, #tpu.memory_space<smem>>) -> (i32, i32) {
    %c0_i32 = arith.constant 0 : i32
    %c0_i32_0 = arith.constant 0 : i32
    %c0_i32_1 = arith.constant 0 : i32
    return %c0_i32, %c0_i32_0 : i32, i32
  }
  func.func @transform_4(%arg0: i32, %arg1: i32, %arg2: memref<2xi32, #tpu.memory_space<smem>>) -> (i32, i32) {
    %c0_i32 = arith.constant 0 : i32
    %c0_i32_0 = arith.constant 0 : i32
    %c0_i32_1 = arith.constant 0 : i32
    return %c0_i32, %c0_i32_0 : i32, i32
  }
  func.func @transform_5(%arg0: i32, %arg1: i32, %arg2: memref<2xi32, #tpu.memory_space<smem>>) -> (i32, i32) {
    %c0_i32 = arith.constant 0 : i32
    %c0_i32_0 = arith.constant 0 : i32
    %c0_i32_1 = arith.constant 0 : i32
    return %c0_i32, %c0_i32_0 : i32, i32
  }
  func.func @transform_6(%arg0: i32, %arg1: i32, %arg2: memref<2xi32, #tpu.memory_space<smem>>) -> (i32, i32) {
    %c0_i32 = arith.constant 0 : i32
    %c0_i32_0 = arith.constant 0 : i32
    %c0_i32_1 = arith.constant 0 : i32
    return %c0_i32, %c0_i32_0 : i32, i32
  }
  func.func @transform_7(%arg0: i32, %arg1: i32, %arg2: memref<2xi32, #tpu.memory_space<smem>>) -> (i32, i32) {
    %c0_i32 = arith.constant 0 : i32
    %c0_i32_0 = arith.constant 0 : i32
    %c0_i32_1 = arith.constant 0 : i32
    return %c0_i32, %c0_i32_0 : i32, i32
  }
  func.func @transform_8(%arg0: i32, %arg1: i32, %arg2: memref<2xi32, #tpu.memory_space<smem>>) -> (i32, i32) {
    %c0_i32 = arith.constant 0 : i32
    %c0_i32_0 = arith.constant 0 : i32
    %c0_i32_1 = arith.constant 0 : i32
    return %c0_i32, %c0_i32_0 : i32, i32
  }
  func.func @transform_9(%arg0: i32, %arg1: i32, %arg2: memref<2xi32, #tpu.memory_space<smem>>) -> (i32, i32, i32) {
    %c0_i32 = arith.constant 0 : i32
    %c0_i32_0 = arith.constant 0 : i32
    return %arg0, %arg1, %c0_i32 : i32, i32, i32
  }
}

module attributes {stable_mosaic.version = 11 : i64} {
  func.func @_conv3_kernel(%arg0: i32, %arg1: memref<1x10x32xbf16, #tpu.memory_space<vmem>>, %arg2: memref<3x32x48xbf16, #tpu.memory_space<vmem>>, %arg3: memref<1x48xf32, #tpu.memory_space<vmem>>, %arg4: memref<1x8x48xbf16, #tpu.memory_space<vmem>>) attributes {dimension_semantics = [#tpu.dimension_semantics<parallel>], iteration_bounds = array<i64: 2>, scalar_prefetch = 0 : i64, scratch_operands = 0 : i64, tpu.core_type = #tpu.core_type<tc>, window_params = [{transform_indices = @transform_0, window_bounds = array<i64: 1, 10, 32>}, {pipeline_mode = #tpu.pipeline_mode<synchronous>, transform_indices = @transform_1, window_bounds = array<i64: 3, 32, 48>}, {pipeline_mode = #tpu.pipeline_mode<synchronous>, transform_indices = @transform_2, window_bounds = array<i64: 1, 48>}, {transform_indices = @transform_3, window_bounds = array<i64: 1, 8, 48>}]} {
    %c0 = arith.constant 0 : index
    %c0_0 = arith.constant 0 : index
    %c0_1 = arith.constant 0 : index
    %0 = vector.load %arg1[%c0, %c0_0, %c0_1] : memref<1x10x32xbf16, #tpu.memory_space<vmem>>, vector<1x8x32xbf16>
    %1 = vector.shape_cast %0 : vector<1x8x32xbf16> to vector<8x32xbf16>
    %c0_2 = arith.constant 0 : index
    %c1 = arith.constant 1 : index
    %c0_3 = arith.constant 0 : index
    %2 = vector.load %arg1[%c0_2, %c1, %c0_3] : memref<1x10x32xbf16, #tpu.memory_space<vmem>>, vector<1x8x32xbf16>
    %3 = vector.shape_cast %2 : vector<1x8x32xbf16> to vector<8x32xbf16>
    %c0_4 = arith.constant 0 : index
    %c2 = arith.constant 2 : index
    %c0_5 = arith.constant 0 : index
    %4 = vector.load %arg1[%c0_4, %c2, %c0_5] : memref<1x10x32xbf16, #tpu.memory_space<vmem>>, vector<1x8x32xbf16>
    %5 = vector.shape_cast %4 : vector<1x8x32xbf16> to vector<8x32xbf16>
    %c0_6 = arith.constant 0 : index
    %c0_7 = arith.constant 0 : index
    %c0_8 = arith.constant 0 : index
    %6 = vector.load %arg2[%c0_6, %c0_7, %c0_8] : memref<3x32x48xbf16, #tpu.memory_space<vmem>>, vector<1x32x48xbf16>
    %7 = vector.shape_cast %6 : vector<1x32x48xbf16> to vector<32x48xbf16>
    %cst = arith.constant dense<0.000000e+00> : vector<8x48xf32>
    %8 = tpu.matmul %1, %7, %cst {dimension_numbers = #tpu.dot_dimension_numbers<[1], [0], [0], [1], [0, 0, 1, 1], [], []>} : vector<8x32xbf16>, vector<32x48xbf16>, vector<8x48xf32> -> vector<8x48xf32>
    %c1_9 = arith.constant 1 : index
    %c0_10 = arith.constant 0 : index
    %c0_11 = arith.constant 0 : index
    %9 = vector.load %arg2[%c1_9, %c0_10, %c0_11] : memref<3x32x48xbf16, #tpu.memory_space<vmem>>, vector<1x32x48xbf16>
    %10 = vector.shape_cast %9 : vector<1x32x48xbf16> to vector<32x48xbf16>
    %cst_12 = arith.constant dense<0.000000e+00> : vector<8x48xf32>
    %11 = tpu.matmul %3, %10, %cst_12 {dimension_numbers = #tpu.dot_dimension_numbers<[1], [0], [0], [1], [0, 0, 1, 1], [], []>} : vector<8x32xbf16>, vector<32x48xbf16>, vector<8x48xf32> -> vector<8x48xf32>
    %12 = arith.addf %8, %11 : vector<8x48xf32>
    %c2_13 = arith.constant 2 : index
    %c0_14 = arith.constant 0 : index
    %c0_15 = arith.constant 0 : index
    %13 = vector.load %arg2[%c2_13, %c0_14, %c0_15] : memref<3x32x48xbf16, #tpu.memory_space<vmem>>, vector<1x32x48xbf16>
    %14 = vector.shape_cast %13 : vector<1x32x48xbf16> to vector<32x48xbf16>
    %cst_16 = arith.constant dense<0.000000e+00> : vector<8x48xf32>
    %15 = tpu.matmul %5, %14, %cst_16 {dimension_numbers = #tpu.dot_dimension_numbers<[1], [0], [0], [1], [0, 0, 1, 1], [], []>} : vector<8x32xbf16>, vector<32x48xbf16>, vector<8x48xf32> -> vector<8x48xf32>
    %16 = arith.addf %12, %15 : vector<8x48xf32>
    %c0_17 = arith.constant 0 : index
    %c0_18 = arith.constant 0 : index
    %17 = vector.load %arg3[%c0_17, %c0_18] : memref<1x48xf32, #tpu.memory_space<vmem>>, vector<1x48xf32>
    %18 = vector.broadcast %17 : vector<1x48xf32> to vector<8x48xf32>
    %19 = arith.addf %16, %18 : vector<8x48xf32>
    %cst_19 = arith.constant 0.000000e+00 : f32
    %20 = vector.broadcast %cst_19 : f32 to vector<8x48xf32>
    %21 = arith.maximumf %19, %20 : vector<8x48xf32>
    %22 = arith.truncf %21 : vector<8x48xf32> to vector<8x48xbf16>
    %c0_20 = arith.constant 0 : index
    %c0_21 = arith.constant 0 : index
    %c0_22 = arith.constant 0 : index
    %23 = vector.load %arg4[%c0_20, %c0_21, %c0_22] : memref<1x8x48xbf16, #tpu.memory_space<vmem>>, vector<1x8x48xbf16>
    %24 = vector.shape_cast %23 : vector<1x8x48xbf16> to vector<8x48xbf16>
    %25 = vector.shape_cast %22 : vector<8x48xbf16> to vector<1x8x48xbf16>
    tpu.vector_store %arg4[%c0_20, %c0_21, %c0_22], %25 {strides = array<i32>} : memref<1x8x48xbf16, #tpu.memory_space<vmem>>, vector<1x8x48xbf16>,
    return
  }
  func.func @transform_0(%arg0: i32) -> (i32, i32, i32) {
    %c0_i32 = arith.constant 0 : i32
    %c0_i32_0 = arith.constant 0 : i32
    %c0_i32_1 = arith.constant 0 : i32
    return %arg0, %c0_i32, %c0_i32_0 : i32, i32, i32
  }
  func.func @transform_1(%arg0: i32) -> (i32, i32, i32) {
    %c0_i32 = arith.constant 0 : i32
    %c0_i32_0 = arith.constant 0 : i32
    %c0_i32_1 = arith.constant 0 : i32
    %c0_i32_2 = arith.constant 0 : i32
    return %c0_i32, %c0_i32_0, %c0_i32_1 : i32, i32, i32
  }
  func.func @transform_2(%arg0: i32) -> (i32, i32) {
    %c0_i32 = arith.constant 0 : i32
    %c0_i32_0 = arith.constant 0 : i32
    %c0_i32_1 = arith.constant 0 : i32
    return %c0_i32, %c0_i32_0 : i32, i32
  }
  func.func @transform_3(%arg0: i32) -> (i32, i32, i32) {
    %c0_i32 = arith.constant 0 : i32
    %c0_i32_0 = arith.constant 0 : i32
    %c0_i32_1 = arith.constant 0 : i32
    return %arg0, %c0_i32, %c0_i32_0 : i32, i32, i32
  }
}

module attributes {stable_mosaic.version = 11 : i64} {
  func.func @_heads_kernel(%arg0: i32, %arg1: memref<16x48xbf16, #tpu.memory_space<vmem>>, %arg2: memref<48x48xbf16, #tpu.memory_space<vmem>>, %arg3: memref<1x48xf32, #tpu.memory_space<vmem>>, %arg4: memref<32x64xbf16, #tpu.memory_space<vmem>>, %arg5: memref<1x64xf32, #tpu.memory_space<vmem>>, %arg6: memref<64x48xbf16, #tpu.memory_space<vmem>>, %arg7: memref<1x48xf32, #tpu.memory_space<vmem>>, %arg8: memref<16x48xf32, #tpu.memory_space<vmem>>, %arg9: memref<16x48xf32, #tpu.memory_space<vmem>>) attributes {dimension_semantics = [#tpu.dimension_semantics<parallel>], iteration_bounds = array<i64: 1>, scalar_prefetch = 0 : i64, scratch_operands = 0 : i64, tpu.core_type = #tpu.core_type<tc>, window_params = [{transform_indices = @transform_0, window_bounds = array<i64: 16, 48>}, {pipeline_mode = #tpu.pipeline_mode<synchronous>, transform_indices = @transform_1, window_bounds = array<i64: 48, 48>}, {pipeline_mode = #tpu.pipeline_mode<synchronous>, transform_indices = @transform_2, window_bounds = array<i64: 1, 48>}, {pipeline_mode = #tpu.pipeline_mode<synchronous>, transform_indices = @transform_3, window_bounds = array<i64: 32, 64>}, {pipeline_mode = #tpu.pipeline_mode<synchronous>, transform_indices = @transform_4, window_bounds = array<i64: 1, 64>}, {pipeline_mode = #tpu.pipeline_mode<synchronous>, transform_indices = @transform_5, window_bounds = array<i64: 64, 48>}, {pipeline_mode = #tpu.pipeline_mode<synchronous>, transform_indices = @transform_6, window_bounds = array<i64: 1, 48>}, {transform_indices = @transform_7, window_bounds = array<i64: 16, 48>}, {transform_indices = @transform_8, window_bounds = array<i64: 16, 48>}]} {
    %c0 = arith.constant 0 : index
    %c0_0 = arith.constant 0 : index
    %0 = vector.load %arg1[%c0, %c0_0] : memref<16x48xbf16, #tpu.memory_space<vmem>>, vector<16x48xbf16>
    %c0_1 = arith.constant 0 : index
    %c0_2 = arith.constant 0 : index
    %1 = vector.load %arg2[%c0_1, %c0_2] : memref<48x48xbf16, #tpu.memory_space<vmem>>, vector<48x48xbf16>
    %cst = arith.constant dense<0.000000e+00> : vector<16x48xf32>
    %2 = tpu.matmul %0, %1, %cst {dimension_numbers = #tpu.dot_dimension_numbers<[1], [0], [0], [1], [0, 0, 1, 1], [], []>} : vector<16x48xbf16>, vector<48x48xbf16>, vector<16x48xf32> -> vector<16x48xf32>
    %c0_3 = arith.constant 0 : index
    %c0_4 = arith.constant 0 : index
    %3 = vector.load %arg3[%c0_3, %c0_4] : memref<1x48xf32, #tpu.memory_space<vmem>>, vector<1x48xf32>
    %4 = vector.broadcast %3 : vector<1x48xf32> to vector<16x48xf32>
    %5 = arith.addf %2, %4 : vector<16x48xf32>
    %c0_5 = arith.constant 0 : index
    %c0_6 = arith.constant 0 : index
    %6 = vector.load %arg8[%c0_5, %c0_6] : memref<16x48xf32, #tpu.memory_space<vmem>>, vector<16x48xf32>
    tpu.vector_store %arg8[%c0_5, %c0_6], %5 {strides = array<i32>} : memref<16x48xf32, #tpu.memory_space<vmem>>, vector<16x48xf32>,
    %7 = vector.extract_strided_slice %5 {offsets = [0, 0], sizes = [16, 32], strides = [1, 1]} : vector<16x48xf32> to vector<16x32xf32>
    %8 = arith.truncf %7 : vector<16x32xf32> to vector<16x32xbf16>
    %c0_7 = arith.constant 0 : index
    %c0_8 = arith.constant 0 : index
    %9 = vector.load %arg4[%c0_7, %c0_8] : memref<32x64xbf16, #tpu.memory_space<vmem>>, vector<32x64xbf16>
    %cst_9 = arith.constant dense<0.000000e+00> : vector<16x64xf32>
    %10 = tpu.matmul %8, %9, %cst_9 {dimension_numbers = #tpu.dot_dimension_numbers<[1], [0], [0], [1], [0, 0, 1, 1], [], []>} : vector<16x32xbf16>, vector<32x64xbf16>, vector<16x64xf32> -> vector<16x64xf32>
    %c0_10 = arith.constant 0 : index
    %c0_11 = arith.constant 0 : index
    %11 = vector.load %arg5[%c0_10, %c0_11] : memref<1x64xf32, #tpu.memory_space<vmem>>, vector<1x64xf32>
    %12 = vector.broadcast %11 : vector<1x64xf32> to vector<16x64xf32>
    %13 = arith.addf %10, %12 : vector<16x64xf32>
    %cst_12 = arith.constant 0.000000e+00 : f32
    %14 = vector.broadcast %cst_12 : f32 to vector<16x64xf32>
    %15 = arith.maximumf %13, %14 : vector<16x64xf32>
    %16 = arith.truncf %15 : vector<16x64xf32> to vector<16x64xbf16>
    %c0_13 = arith.constant 0 : index
    %c0_14 = arith.constant 0 : index
    %17 = vector.load %arg6[%c0_13, %c0_14] : memref<64x48xbf16, #tpu.memory_space<vmem>>, vector<64x48xbf16>
    %cst_15 = arith.constant dense<0.000000e+00> : vector<16x48xf32>
    %18 = tpu.matmul %16, %17, %cst_15 {dimension_numbers = #tpu.dot_dimension_numbers<[1], [0], [0], [1], [0, 0, 1, 1], [], []>} : vector<16x64xbf16>, vector<64x48xbf16>, vector<16x48xf32> -> vector<16x48xf32>
    %c0_16 = arith.constant 0 : index
    %c0_17 = arith.constant 0 : index
    %19 = vector.load %arg7[%c0_16, %c0_17] : memref<1x48xf32, #tpu.memory_space<vmem>>, vector<1x48xf32>
    %20 = vector.broadcast %19 : vector<1x48xf32> to vector<16x48xf32>
    %21 = arith.addf %18, %20 : vector<16x48xf32>
    %c0_18 = arith.constant 0 : index
    %c0_19 = arith.constant 0 : index
    %22 = vector.load %arg9[%c0_18, %c0_19] : memref<16x48xf32, #tpu.memory_space<vmem>>, vector<16x48xf32>
    tpu.vector_store %arg9[%c0_18, %c0_19], %21 {strides = array<i32>} : memref<16x48xf32, #tpu.memory_space<vmem>>, vector<16x48xf32>,
    return
  }
  func.func @transform_0(%arg0: i32) -> (i32, i32) {
    %c0_i32 = arith.constant 0 : i32
    %c0_i32_0 = arith.constant 0 : i32
    return %arg0, %c0_i32 : i32, i32
  }
  func.func @transform_1(%arg0: i32) -> (i32, i32) {
    %c0_i32 = arith.constant 0 : i32
    %c0_i32_0 = arith.constant 0 : i32
    %c0_i32_1 = arith.constant 0 : i32
    return %c0_i32, %c0_i32_0 : i32, i32
  }
  func.func @transform_2(%arg0: i32) -> (i32, i32) {
    %c0_i32 = arith.constant 0 : i32
    %c0_i32_0 = arith.constant 0 : i32
    %c0_i32_1 = arith.constant 0 : i32
    return %c0_i32, %c0_i32_0 : i32, i32
  }
  func.func @transform_3(%arg0: i32) -> (i32, i32) {
    %c0_i32 = arith.constant 0 : i32
    %c0_i32_0 = arith.constant 0 : i32
    %c0_i32_1 = arith.constant 0 : i32
    return %c0_i32, %c0_i32_0 : i32, i32
  }
  func.func @transform_4(%arg0: i32) -> (i32, i32) {
    %c0_i32 = arith.constant 0 : i32
    %c0_i32_0 = arith.constant 0 : i32
    %c0_i32_1 = arith.constant 0 : i32
    return %c0_i32, %c0_i32_0 : i32, i32
  }
  func.func @transform_5(%arg0: i32) -> (i32, i32) {
    %c0_i32 = arith.constant 0 : i32
    %c0_i32_0 = arith.constant 0 : i32
    %c0_i32_1 = arith.constant 0 : i32
    return %c0_i32, %c0_i32_0 : i32, i32
  }
  func.func @transform_6(%arg0: i32) -> (i32, i32) {
    %c0_i32 = arith.constant 0 : i32
    %c0_i32_0 = arith.constant 0 : i32
    %c0_i32_1 = arith.constant 0 : i32
    return %c0_i32, %c0_i32_0 : i32, i32
  }
  func.func @transform_7(%arg0: i32) -> (i32, i32) {
    %c0_i32 = arith.constant 0 : i32
    %c0_i32_0 = arith.constant 0 : i32
    return %arg0, %c0_i32 : i32, i32
  }
  func.func @transform_8(%arg0: i32) -> (i32, i32) {
    %c0_i32 = arith.constant 0 : i32
    %c0_i32_0 = arith.constant 0 : i32
    return %arg0, %c0_i32 : i32, i32
  }
}

module attributes {stable_mosaic.version = 11 : i64} {
  func.func @_conv3_kernel(%arg0: i32, %arg1: memref<1x10x48xbf16, #tpu.memory_space<vmem>>, %arg2: memref<3x48x20xbf16, #tpu.memory_space<vmem>>, %arg3: memref<1x20xf32, #tpu.memory_space<vmem>>, %arg4: memref<1x8x20xf32, #tpu.memory_space<vmem>>) attributes {dimension_semantics = [#tpu.dimension_semantics<parallel>], iteration_bounds = array<i64: 2>, scalar_prefetch = 0 : i64, scratch_operands = 0 : i64, tpu.core_type = #tpu.core_type<tc>, window_params = [{transform_indices = @transform_0, window_bounds = array<i64: 1, 10, 48>}, {pipeline_mode = #tpu.pipeline_mode<synchronous>, transform_indices = @transform_1, window_bounds = array<i64: 3, 48, 20>}, {pipeline_mode = #tpu.pipeline_mode<synchronous>, transform_indices = @transform_2, window_bounds = array<i64: 1, 20>}, {transform_indices = @transform_3, window_bounds = array<i64: 1, 8, 20>}]} {
    %c0 = arith.constant 0 : index
    %c0_0 = arith.constant 0 : index
    %c0_1 = arith.constant 0 : index
    %0 = vector.load %arg1[%c0, %c0_0, %c0_1] : memref<1x10x48xbf16, #tpu.memory_space<vmem>>, vector<1x8x48xbf16>
    %1 = vector.shape_cast %0 : vector<1x8x48xbf16> to vector<8x48xbf16>
    %c0_2 = arith.constant 0 : index
    %c1 = arith.constant 1 : index
    %c0_3 = arith.constant 0 : index
    %2 = vector.load %arg1[%c0_2, %c1, %c0_3] : memref<1x10x48xbf16, #tpu.memory_space<vmem>>, vector<1x8x48xbf16>
    %3 = vector.shape_cast %2 : vector<1x8x48xbf16> to vector<8x48xbf16>
    %c0_4 = arith.constant 0 : index
    %c2 = arith.constant 2 : index
    %c0_5 = arith.constant 0 : index
    %4 = vector.load %arg1[%c0_4, %c2, %c0_5] : memref<1x10x48xbf16, #tpu.memory_space<vmem>>, vector<1x8x48xbf16>
    %5 = vector.shape_cast %4 : vector<1x8x48xbf16> to vector<8x48xbf16>
    %c0_6 = arith.constant 0 : index
    %c0_7 = arith.constant 0 : index
    %c0_8 = arith.constant 0 : index
    %6 = vector.load %arg2[%c0_6, %c0_7, %c0_8] : memref<3x48x20xbf16, #tpu.memory_space<vmem>>, vector<1x48x20xbf16>
    %7 = vector.shape_cast %6 : vector<1x48x20xbf16> to vector<48x20xbf16>
    %cst = arith.constant dense<0.000000e+00> : vector<8x20xf32>
    %8 = tpu.matmul %1, %7, %cst {dimension_numbers = #tpu.dot_dimension_numbers<[1], [0], [0], [1], [0, 0, 1, 1], [], []>} : vector<8x48xbf16>, vector<48x20xbf16>, vector<8x20xf32> -> vector<8x20xf32>
    %c1_9 = arith.constant 1 : index
    %c0_10 = arith.constant 0 : index
    %c0_11 = arith.constant 0 : index
    %9 = vector.load %arg2[%c1_9, %c0_10, %c0_11] : memref<3x48x20xbf16, #tpu.memory_space<vmem>>, vector<1x48x20xbf16>
    %10 = vector.shape_cast %9 : vector<1x48x20xbf16> to vector<48x20xbf16>
    %cst_12 = arith.constant dense<0.000000e+00> : vector<8x20xf32>
    %11 = tpu.matmul %3, %10, %cst_12 {dimension_numbers = #tpu.dot_dimension_numbers<[1], [0], [0], [1], [0, 0, 1, 1], [], []>} : vector<8x48xbf16>, vector<48x20xbf16>, vector<8x20xf32> -> vector<8x20xf32>
    %12 = arith.addf %8, %11 : vector<8x20xf32>
    %c2_13 = arith.constant 2 : index
    %c0_14 = arith.constant 0 : index
    %c0_15 = arith.constant 0 : index
    %13 = vector.load %arg2[%c2_13, %c0_14, %c0_15] : memref<3x48x20xbf16, #tpu.memory_space<vmem>>, vector<1x48x20xbf16>
    %14 = vector.shape_cast %13 : vector<1x48x20xbf16> to vector<48x20xbf16>
    %cst_16 = arith.constant dense<0.000000e+00> : vector<8x20xf32>
    %15 = tpu.matmul %5, %14, %cst_16 {dimension_numbers = #tpu.dot_dimension_numbers<[1], [0], [0], [1], [0, 0, 1, 1], [], []>} : vector<8x48xbf16>, vector<48x20xbf16>, vector<8x20xf32> -> vector<8x20xf32>
    %16 = arith.addf %12, %15 : vector<8x20xf32>
    %c0_17 = arith.constant 0 : index
    %c0_18 = arith.constant 0 : index
    %17 = vector.load %arg3[%c0_17, %c0_18] : memref<1x20xf32, #tpu.memory_space<vmem>>, vector<1x20xf32>
    %18 = vector.broadcast %17 : vector<1x20xf32> to vector<8x20xf32>
    %19 = arith.addf %16, %18 : vector<8x20xf32>
    %c0_19 = arith.constant 0 : index
    %c0_20 = arith.constant 0 : index
    %c0_21 = arith.constant 0 : index
    %20 = vector.load %arg4[%c0_19, %c0_20, %c0_21] : memref<1x8x20xf32, #tpu.memory_space<vmem>>, vector<1x8x20xf32>
    %21 = vector.shape_cast %20 : vector<1x8x20xf32> to vector<8x20xf32>
    %22 = vector.shape_cast %19 : vector<8x20xf32> to vector<1x8x20xf32>
    tpu.vector_store %arg4[%c0_19, %c0_20, %c0_21], %22 {strides = array<i32>} : memref<1x8x20xf32, #tpu.memory_space<vmem>>, vector<1x8x20xf32>,
    return
  }
  func.func @transform_0(%arg0: i32) -> (i32, i32, i32) {
    %c0_i32 = arith.constant 0 : i32
    %c0_i32_0 = arith.constant 0 : i32
    %c0_i32_1 = arith.constant 0 : i32
    return %arg0, %c0_i32, %c0_i32_0 : i32, i32, i32
  }
  func.func @transform_1(%arg0: i32) -> (i32, i32, i32) {
    %c0_i32 = arith.constant 0 : i32
    %c0_i32_0 = arith.constant 0 : i32
    %c0_i32_1 = arith.constant 0 : i32
    %c0_i32_2 = arith.constant 0 : i32
    return %c0_i32, %c0_i32_0, %c0_i32_1 : i32, i32, i32
  }
  func.func @transform_2(%arg0: i32) -> (i32, i32) {
    %c0_i32 = arith.constant 0 : i32
    %c0_i32_0 = arith.constant 0 : i32
    %c0_i32_1 = arith.constant 0 : i32
    return %c0_i32, %c0_i32_0 : i32, i32
  }
  func.func @transform_3(%arg0: i32) -> (i32, i32, i32) {
    %c0_i32 = arith.constant 0 : i32
    %c0_i32_0 = arith.constant 0 : i32
    %c0_i32_1 = arith.constant 0 : i32
    return %arg0, %c0_i32, %c0_i32_0 : i32, i32, i32
  }
}

</mosaic_0001>

<llo_original>
// kernel: base_hubert_forward.5
$region0: #{base_hubert_forward.5}
  #allocation0 [shape = 'u32[]', space=smem, size = 0x4, offset = 0x4, fixed_abs, tag = 'smem constant byte address 0x4 - core index']
  #allocation1 [shape = 'u32[72,128]{1,0:T(1,128)}', space=vmem, size = 0x9000, scoped, tag = 'internal scratch']
  %s0 = inlined_call_operand.vmem [shape: bf16[2,10,32], index: 0, kind: input, shape index: {}]
  %s1 = inlined_call_operand.vmem [shape: bf16[3,32,48], index: 1, kind: input, shape index: {}]
  %s2 = inlined_call_operand.vmem [shape: f32[1,48], index: 2, kind: input, shape index: {}]
  %s3 = inlined_call_operand.vmem [shape: bf16[2,8,48], index: 3, kind: output, shape index: {}]
  %s4 = sld [smem:[#allocation0]]
  $region45: #{base_hubert_forward.5} parent=0
    _
  %s6 = ssub.s32 1, %s4
  %s7 = scalar_select 0, %s6, %s4
  loop: start=0, step=1, limit=4
  $region2: #{base_hubert_forward.5} parent=0 // loop_pre_header
    _
  $region3: #{base_hubert_forward.5} parent=0 // loop_header
    %s9 = sphi 0, %s13
    %p10 = scmp.ge.s32.totalorder %s9, 4
    %s19 = sphi 0, %s21
    %s22 = sphi 0, %s19
    %s23 = sphi 0, %s22
    %s39 = sphi 0, %s23
    %s43 = sphi 0, %s43
    %s45 = sphi 0, %s43
    %s46 = sphi 0, %s45
    %s60 = sphi 0, %s46
    %s64 = sphi 0, %s64
    %s66 = sphi 0, %s64
    %s67 = sphi 0, %s66
    %s81 = sphi 0, %s67
    %s87 = sphi 0, %s89
    %s90 = sphi 0, %s87
    %s91 = sphi 0, %s90
    %s107 = sphi 0, %s91
  $region4: #{base_hubert_forward.5} parent=0 // loop_header_branch
    %12 = sbr.rel (%p10) target = $region8
  $region5: #{base_hubert_forward.5} parent=0 // loop_body
    %s14 = ssub.s32 %s9, 1
    %s15 = ssub.s32 %s9, 2
    %s16 = sadd.s32 %s9, 1
    %s17 = ssub.s32 %s9, %s16
    %p18 = scmp.eq.s32.totalorder %s17, 0
    %s20 = sadd.s32 %s19, 1
    %s21 = scalar_select %p18, %s19, %s20
    %p24 = pneg %p18
    %p25 = scmp.eq.s32.totalorder %s9, 1
    %p26 = por %p24, %p25
    %p27 = scmp.ne.s32.totalorder %s19, %s22
    %p28 = scmp.eq.s32.totalorder %s9, 0
    %p29 = por %p27, %p28
    %p30 = scmp.ne.s32.totalorder %s19, %s22
    %p31 = scmp.eq.s32.totalorder %s14, 1
    %p32 = por %p30, %p31
    %p33 = scmp.ne.s32.totalorder %s22, %s23
    %p34 = scmp.eq.s32.totalorder %s14, 0
    %p35 = por %p33, %p34
    %p36 = scmp.ne.s32.totalorder %s22, %s23
    %p37 = scmp.eq.s32.totalorder %s15, 1
    %p38 = por %p36, %p37
    %p40 = scmp.ne.s32.totalorder %s23, %s39
    %p41 = scmp.eq.s32.totalorder %s15, 0
    %p42 = por %p40, %p41
    %s44 = sadd.s32 %s43, 1
    %p47 = scmp.eq.s32.totalorder %s9, 1
    %p48 = scmp.ne.s32.totalorder %s43, %s45
    %p49 = scmp.eq.s32.totalorder %s9, 0
    %p50 = por %p48, %p49
    %p51 = scmp.ne.s32.totalorder %s43, %s45
    %p52 = scmp.eq.s32.totalorder %s14, 1
    %p53 = por %p51, %p52
    %p54 = scmp.ne.s32.totalorder %s45, %s46
    %p55 = scmp.eq.s32.totalorder %s14, 0
    %p56 = por %p54, %p55
    %p57 = scmp.ne.s32.totalorder %s45, %s46
    %p58 = scmp.eq.s32.totalorder %s15, 1
    %p59 = por %p57, %p58
    %p61 = scmp.ne.s32.totalorder %s46, %s60
    %p62 = scmp.eq.s32.totalorder %s15, 0
    %p63 = por %p61, %p62
    %s65 = sadd.s32 %s64, 1
    %p68 = scmp.eq.s32.totalorder %s9, 1
    %p69 = scmp.ne.s32.totalorder %s64, %s66
    %p70 = scmp.eq.s32.totalorder %s9, 0
    %p71 = por %p69, %p70
    %p72 = scmp.ne.s32.totalorder %s64, %s66
    %p73 = scmp.eq.s32.totalorder %s14, 1
    %p74 = por %p72, %p73
    %p75 = scmp.ne.s32.totalorder %s66, %s67
    %p76 = scmp.eq.s32.totalorder %s14, 0
    %p77 = por %p75, %p76
    %p78 = scmp.ne.s32.totalorder %s66, %s67
    %p79 = scmp.eq.s32.totalorder %s15, 1
    %p80 = por %p78, %p79
    %p82 = scmp.ne.s32.totalorder %s67, %s81
    %p83 = scmp.eq.s32.totalorder %s15, 0
    %p84 = por %p82, %p83
    %s85 = ssub.s32 %s9, %s16
    %p86 = scmp.eq.s32.totalorder %s85, 0
    %s88 = sadd.s32 %s87, 1
    %s89 = scalar_select %p86, %s87, %s88
    %p92 = pneg %p86
    %p93 = scmp.eq.s32.totalorder %s9, 1
    %p94 = por %p92, %p93
    %p95 = scmp.ne.s32.totalorder %s87, %s90
    %p96 = scmp.eq.s32.totalorder %s9, 0
    %p97 = por %p95, %p96
    %p98 = scmp.ne.s32.totalorder %s87, %s90
    %p99 = scmp.eq.s32.totalorder %s14, 1
    %p100 = por %p98, %p99
    %p101 = scmp.ne.s32.totalorder %s90, %s91
    %p102 = scmp.eq.s32.totalorder %s14, 0
    %p103 = por %p101, %p102
    %p104 = scmp.ne.s32.totalorder %s90, %s91
    %p105 = scmp.eq.s32.totalorder %s15, 1
    %p106 = por %p104, %p105
    %p108 = scmp.ne.s32.totalorder %s91, %s107
    %p109 = scmp.eq.s32.totalorder %s15, 0
    %p110 = por %p108, %p109
    %p111 = scmp.le.s32.totalorder 1, %s9
    %p112 = scmp.lt.s32.totalorder %s9, 3
    %p113 = pnand %p111, %p112
    %p114 = pneg %p113
    // Predicated region
    $region9: #{base_hubert_forward.5} parent=5 // pred_check
      _
    $region10: #{base_hubert_forward.5} parent=5 // pred_check_branch
      %116 = sbr.rel (%p113) target = $region12
    $region11: #{base_hubert_forward.5} parent=5 // pred_region
      %s117 = ssub.s32 %s9, 1
      // Predicated region
      $region13: #{base_hubert_forward.5} parent=11 // pred_check
        %p118 = pneg %p56
      $region14: #{base_hubert_forward.5} parent=11 // pred_check_branch
        %120 = sbr.rel (%p118) target = $region16
      $region15: #{base_hubert_forward.5} parent=11 // pred_region
        _
      $region16: #{base_hubert_forward.5} parent=11 // pred_fallthru
        _
      // Predicated region
      $region17: #{base_hubert_forward.5} parent=11 // pred_check
        %p121 = pneg %p77
      $region18: #{base_hubert_forward.5} parent=11 // pred_check_branch
        %123 = sbr.rel (%p121) target = $region20
      $region19: #{base_hubert_forward.5} parent=11 // pred_region
        _
      $region20: #{base_hubert_forward.5} parent=11 // pred_fallthru
        _
    $region12: #{base_hubert_forward.5} parent=5 // pred_fallthru
      _
    %p124 = scmp.lt.s32.totalorder %s9, 2
    // Predicated region
    $region21: #{base_hubert_forward.5} parent=5 // pred_check
      %p125 = pneg %p124
    $region22: #{base_hubert_forward.5} parent=5 // pred_check_branch
      %127 = sbr.rel (%p125) target = $region24
    $region23: #{base_hubert_forward.5} parent=5 // pred_region
      // Predicated region
      $region25: #{base_hubert_forward.5} parent=23 // pred_check
        %p128 = pneg %p29
      $region26: #{base_hubert_forward.5} parent=23 // pred_check_branch
        %130 = sbr.rel (%p128) target = $region28
      $region27: #{base_hubert_forward.5} parent=23 // pred_region
        %p131 = scmp.lt.s32.totalorder %s9, 1
        %s132 = scalar_select %p131, %s9, 1
        %s133 = smul.addr %s132, 2
        %s134 = smul.addr %s133, 4
        %s135 = scalar_lea.vmem %s0, %s134
      $region28: #{base_hubert_forward.5} parent=23 // pred_fallthru
        _
    $region24: #{base_hubert_forward.5} parent=5 // pred_fallthru
      _
    %p136 = scmp.le.s32.totalorder 1, %s9
    %p137 = scmp.lt.s32.totalorder %s9, 3
    %p138 = pnand %p136, %p137
    %p139 = pneg %p138
    // Predicated region
    $region29: #{base_hubert_forward.5} parent=5 // pred_check
      _
    $region30: #{base_hubert_forward.5} parent=5 // pred_check_branch
      %141 = sbr.rel (%p138) target = $region32
    $region31: #{base_hubert_forward.5} parent=5 // pred_region
      %s142 = ssub.s32 %s9, 1
      %p143 = scmp.lt.s32.totalorder %s14, 1
      %s144 = scalar_select %p143, %s14, 1
      %s145 = smul.addr %s144, 2
      %s146 = smul.addr %s145, 4
      %s147 = scalar_lea.vmem %s0, %s146
      %p148 = pneg %p35
      %p149 = pneg %p32
      %p150 = pneg %p56
      %p151 = pneg %p53
      %p152 = pneg %p77
      %p153 = pneg %p74
      %p154 = pneg %p103
      %p155 = pneg %p100
      %p156 = scmp.lt.s32.totalorder %s14, 1
      %s157 = scalar_select %p156, %s14, 1
      %s158 = smul.addr %s157, 4
      %s159 = scalar_lea.vmem %s3, %s158
      %p160 = scmp.lt.s32.totalorder %s14, 1
      %s161 = scalar_select %p160, %s14, 1
      %s162 = smul.addr %s161, 2
      %s163 = smul.addr %s162, 4
      %s164 = scalar_lea.vmem %s0, %s163
      %p165 = scmp.lt.s32.totalorder %s14, 1
      %s166 = scalar_select %p165, %s14, 1
      %s167 = smul.addr %s166, 4
      %s168 = scalar_lea.vmem %s3, %s167
      %v170 = vld [vmem:[%s164] sm:$0xf]
      %v171 = vld [vmem:[%s164 + $0x4] sm:$0x1]
      %v172 = vld [vmem:[%s164] sm:$0xe]
      %v173 = vld [vmem:[%s1] sm:$0xf]
      %v174 = vld [vmem:[%s1 + $0x4] sm:$0xf]
      %v175 = vld [vmem:[%s1 + $0x8] sm:$0xf]
      %v176 = vld [vmem:[%s1 + $0xc] sm:$0xf]
      %s177 = scalar_lea.vmem %s1, 16
      %v178 = vld [vmem:[%s177] sm:$0xf]
      %v179 = vld [vmem:[%s177 + $0x4] sm:$0xf]
      %v180 = vld [vmem:[%s177 + $0x8] sm:$0xf]
      %v181 = vld [vmem:[%s177 + $0xc] sm:$0xf]
      %v184 = vunpack.c.l.b16 %v170
      %v185 = vunpack.c.l.b16 %v171
      %v186 = vpack.c.b16 %v185, %v184
      %v188 = vshrl.u32 %v186, 16
      %v190 = vshll.u32 %v186, 16
      %v192 = vrot.slane %v190, 1
      %v193 = vor.u32 %v188, %v192
      %v198 = vunpack.c.l.b16 %v178
      %v199 = vunpack.c.l.b16 %v179
      %v200 = vunpack.c.l.b16 %v180
      %v201 = vunpack.c.l.b16 %v181
      %v202 = vpack.c.b16 %v199, %v198
      %v203 = vpack.c.b16 %v201, %v200
      %vm206 = vcmask 261120
      %v208 = vsel %vm206, %v193, 0
      %210 = vmatpush.bf16.msra.mxu0 0
      %211 = vmatpush.bf16.msra.mxu0 0
      %212 = vmatpush.bf16.msra.mxu0 0
      %213 = vmatpush.bf16.msra.mxu0 0
      %214 = vmatpush.bf16.msra.mxu0 0
      %215 = vmatpush.bf16.msra.mxu0 0
      %216 = vmatpush.bf16.msra.mxu0 %v203
      %217 = vmatpush.bf16.msra.mxu0 %v202
      %218 = vmatmul.bf16.gmra.mxu0 %v208
      %v219 = vpop.f32.mrf.mxu0
      %v220 = vadd.f32 0.0, %v219
      %v221 = vpop.f32.mrf.mxu0
      %222 = vdwg.mxu0
      %v227 = vunpack.c.l.b16 %v173
      %v228 = vunpack.c.l.b16 %v174
      %v229 = vunpack.c.l.b16 %v175
      %v230 = vunpack.c.l.b16 %v176
      %v231 = vpack.c.b16 %v228, %v227
      %v232 = vpack.c.b16 %v230, %v229
      %v236 = vsel %vm206, %v170, 0
      %238 = vmatpush.bf16.msra.mxu0 0
      %239 = vmatpush.bf16.msra.mxu0 0
      %240 = vmatpush.bf16.msra.mxu0 0
      %241 = vmatpush.bf16.msra.mxu0 0
      %242 = vmatpush.bf16.msra.mxu0 0
      %243 = vmatpush.bf16.msra.mxu0 0
      %244 = vmatpush.bf16.msra.mxu0 %v232
      %245 = vmatpush.bf16.msra.mxu0 %v231
      %246 = vmatmul.bf16.gmra.mxu0 %v236
      %v247 = vpop.f32.mrf.mxu0
      %v248 = vadd.f32 %v220, %v247
      %v249 = vpop.f32.mrf.mxu0
      %250 = vdwg.mxu0
      %s251 = scalar_lea.vmem %s1, 32
      %v252 = vld [vmem:[%s251] sm:$0xf]
      %v253 = vld [vmem:[%s251 + $0x4] sm:$0xf]
      %v254 = vld [vmem:[%s251 + $0x8] sm:$0xf]
      %v255 = vld [vmem:[%s251 + $0xc] sm:$0xf]
      %v257 = vunpack.c.l.b16 %v172
      %v258 = vpack.c.b16 %v185, %v257
      %v259 = vrot.slane %v258, 1
      %v264 = vunpack.c.l.b16 %v252
      %v265 = vunpack.c.l.b16 %v253
      %v266 = vunpack.c.l.b16 %v254
      %v267 = vunpack.c.l.b16 %v255
      %v268 = vpack.c.b16 %v265, %v264
      %v269 = vpack.c.b16 %v267, %v266
      %v273 = vsel %vm206, %v259, 0
      %275 = vmatpush.bf16.msra.mxu0 0
      %276 = vmatpush.bf16.msra.mxu0 0
      %277 = vmatpush.bf16.msra.mxu0 0
      %278 = vmatpush.bf16.msra.mxu0 0
      %279 = vmatpush.bf16.msra.mxu0 0
      %280 = vmatpush.bf16.msra.mxu0 0
      %281 = vmatpush.bf16.msra.mxu0 %v269
      %282 = vmatpush.bf16.msra.mxu0 %v268
      %283 = vmatmul.bf16.gmra.mxu0 %v273
      %v284 = vpop.f32.mrf.mxu0
      %v285 = vadd.f32 0.0, %v284
      %v286 = vpop.f32.mrf.mxu0
      %287 = vdwg.mxu0
      %v288 = vadd.f32 %v248, %v285
      %v289 = vld [vmem:[%s2] sm:$0x1]
      %v291 = vperm.slane %v289, 0
      %v293 = vadd.f32 %v288, %v291
      %v294 = vmax.f32 %v293, 0.0
      %v295 = vpack.c.bf16 %v294, %v294
      %vm296 = vcmask 388096
      %297 = vst.msk [vmem:[%s168] sm:$0xf] %vm296, %v295
      %p298 = scmp.lt.s32.totalorder %s14, 1
      %s299 = scalar_select %p298, %s14, 1
      %s300 = smul.addr %s299, 4
      %s301 = scalar_lea.vmem %s3, %s300
      // Predicated region
      $region33: #{base_hubert_forward.5} parent=31 // pred_check
        %p302 = pneg %p100
      $region34: #{base_hubert_forward.5} parent=31 // pred_check_branch
        %304 = sbr.rel (%p302) target = $region36
      $region35: #{base_hubert_forward.5} parent=31 // pred_region
        _
      $region36: #{base_hubert_forward.5} parent=31 // pred_fallthru
        _
    $region32: #{base_hubert_forward.5} parent=5 // pred_fallthru
      _
    %p305 = scmp.le.s32.totalorder 2, %s9
    // Predicated region
    $region37: #{base_hubert_forward.5} parent=5 // pred_check
      %p306 = pneg %p305
    $region38: #{base_hubert_forward.5} parent=5 // pred_check_branch
      %308 = sbr.rel (%p306) target = $region40
    $region39: #{base_hubert_forward.5} parent=5 // pred_region
      %s309 = ssub.s32 %s9, 2
      // Predicated region
      $region41: #{base_hubert_forward.5} parent=39 // pred_check
        %p310 = pneg %p106
      $region42: #{base_hubert_forward.5} parent=39 // pred_check_branch
        %312 = sbr.rel (%p310) target = $region44
      $region43: #{base_hubert_forward.5} parent=39 // pred_region
        %p313 = scmp.lt.s32.totalorder %s15, 1
        %s314 = scalar_select %p313, %s15, 1
        %s315 = smul.addr %s314, 4
        %s316 = scalar_lea.vmem %s3, %s315
      $region44: #{base_hubert_forward.5} parent=39 // pred_fallthru
        _
    $region40: #{base_hubert_forward.5} parent=5 // pred_fallthru
      _
  $region6: #{base_hubert_forward.5} parent=0 // loop_footer
    %s13 = sadd.s32 1, %s9
  $region7: #{base_hubert_forward.5} parent=0 // loop_footer_branch
    %8 = sbr.rel target = $region3
  $region8: #{base_hubert_forward.5} parent=0 // loop_exit
    _

// kernel: base_hubert_forward.4
$region0: #{base_hubert_forward.4}
  #allocation0 [shape = 'u32[]', space=smem, size = 0x4, offset = 0x4, fixed_abs, tag = 'smem constant byte address 0x4 - core index']
  #allocation1 [shape = 'u32[72,128]{1,0:T(1,128)}', space=vmem, size = 0x9000, scoped, tag = 'internal scratch']
  #allocation2 [shape = 's32[1]{0}', space=sflag, size = 0x4, scoped, tag = 'scoped memory for base_hubert_forward.4']
  #allocation3 [shape = 'u8[512]{0}', space=smem, size = 0x200, scoped, tag = 'prefetched SMEM operand 0']
  %s0 = inlined_call_operand.vmem [shape: s32[2], index: 0, kind: input, shape index: {}]
  %s1 = inlined_call_operand.vmem [shape: bf16[2,8,256], index: 1, kind: input, shape index: {}]
  %s2 = inlined_call_operand.vmem [shape: bf16[2,1,16], index: 2, kind: input, shape index: {}]
  %s3 = inlined_call_operand.vmem [shape: bf16[256,72], index: 3, kind: input, shape index: {}]
  %s4 = inlined_call_operand.vmem [shape: f32[1,72], index: 4, kind: input, shape index: {}]
  %s5 = inlined_call_operand.vmem [shape: bf16[72,32], index: 5, kind: input, shape index: {}]
  %s6 = inlined_call_operand.vmem [shape: f32[1,32], index: 6, kind: input, shape index: {}]
  %s7 = inlined_call_operand.vmem [shape: bf16[32,32], index: 7, kind: input, shape index: {}]
  %s8 = inlined_call_operand.vmem [shape: bf16[16,32], index: 8, kind: input, shape index: {}]
  %s9 = inlined_call_operand.vmem [shape: f32[1,32], index: 9, kind: input, shape index: {}]
  %s10 = inlined_call_operand.vmem [shape: bf16[2,8,32], index: 10, kind: output, shape index: {}]
  %s11 = sld [smem:[#allocation0]]
  $region69: #{base_hubert_forward.4} parent=0
    _
  %s13 = ssub.s32 1, %s11
  %s14 = scalar_select 0, %s13, %s11
  %s16 = sshll.u32 %s0, 4
  %s17 = int_to_ptr.vmem [resolvable:$true] %s16
  %19 = dma.vmem_to_smem %s17, 16, [#allocation3], [#allocation2]
  %21 = dma.done [#allocation2], 16
  %22 = sfence
  loop: start=0, step=1, limit=4
  $region2: #{base_hubert_forward.4} parent=0 // loop_pre_header
    _
  $region3: #{base_hubert_forward.4} parent=0 // loop_header
    %s24 = sphi 0, %s28
    %p25 = scmp.ge.s32.totalorder %s24, 4
    %s31 = sphi 0, %s43
    %s32 = sphi 0, %s39
    %s33 = sphi 0, %s31
    %s34 = sphi 0, %s32
    %s35 = sphi 0, %s33
    %s36 = sphi 0, %s34
    %s48 = sphi 0, %s50
    %s51 = sphi 0, %s48
    %s52 = sphi 0, %s51
    %s68 = sphi 0, %s52
    %s74 = sphi 0, %s76
    %s77 = sphi 0, %s74
    %s78 = sphi 0, %s77
    %s94 = sphi 0, %s78
    %s98 = sphi 0, %s98
    %s100 = sphi 0, %s98
    %s101 = sphi 0, %s100
    %s115 = sphi 0, %s101
    %s119 = sphi 0, %s119
    %s121 = sphi 0, %s119
    %s122 = sphi 0, %s121
    %s136 = sphi 0, %s122
    %s140 = sphi 0, %s140
    %s142 = sphi 0, %s140
    %s143 = sphi 0, %s142
    %s157 = sphi 0, %s143
    %s161 = sphi 0, %s161
    %s163 = sphi 0, %s161
    %s164 = sphi 0, %s163
    %s178 = sphi 0, %s164
    %s182 = sphi 0, %s182
    %s184 = sphi 0, %s182
    %s185 = sphi 0, %s184
    %s199 = sphi 0, %s185
    %s203 = sphi 0, %s203
    %s205 = sphi 0, %s203
    %s206 = sphi 0, %s205
    %s220 = sphi 0, %s206
    %s224 = sphi 0, %s224
    %s226 = sphi 0, %s224
    %s227 = sphi 0, %s226
    %s241 = sphi 0, %s227
    %s249 = sphi 0, %s251
    %s252 = sphi 0, %s249
    %s253 = sphi 0, %s252
    %s269 = sphi 0, %s253
  $region4: #{base_hubert_forward.4} parent=0 // loop_header_branch
    %27 = sbr.rel (%p25) target = $region8
  $region5: #{base_hubert_forward.4} parent=0 // loop_body
    %s29 = ssub.s32 %s24, 1
    %s30 = ssub.s32 %s24, 2
    %s37 = sadd.s32 1, %s32
    %p38 = scmp.ge.s32.totalorder %s37, 1
    %s39 = scalar_select %p38, 0, %s37
    %s40 = sadd.s32 1, %s31
    %s41 = scalar_select %p38, %s40, %s31
    %p42 = scmp.ge.s32.totalorder %s41, 2
    %s43 = scalar_select %p42, 0, %s41
    %s44 = ssub.s32 %s31, %s43
    %s45 = ssub.s32 %s32, %s39
    %s46 = sor.u32 %s44, %s45
    %p47 = scmp.eq.s32.totalorder %s46, 0
    %s49 = sadd.s32 %s48, 1
    %s50 = scalar_select %p47, %s48, %s49
    %p53 = pneg %p47
    %p54 = scmp.eq.s32.totalorder %s24, 1
    %p55 = por %p53, %p54
    %p56 = scmp.ne.s32.totalorder %s48, %s51
    %p57 = scmp.eq.s32.totalorder %s24, 0
    %p58 = por %p56, %p57
    %p59 = scmp.ne.s32.totalorder %s48, %s51
    %p60 = scmp.eq.s32.totalorder %s29, 1
    %p61 = por %p59, %p60
    %p62 = scmp.ne.s32.totalorder %s51, %s52
    %p63 = scmp.eq.s32.totalorder %s29, 0
    %p64 = por %p62, %p63
    %p65 = scmp.ne.s32.totalorder %s51, %s52
    %p66 = scmp.eq.s32.totalorder %s30, 1
    %p67 = por %p65, %p66
    %p69 = scmp.ne.s32.totalorder %s52, %s68
    %p70 = scmp.eq.s32.totalorder %s30, 0
    %p71 = por %p69, %p70
    %s72 = ssub.s32 %s31, %s43
    %p73 = scmp.eq.s32.totalorder %s72, 0
    %s75 = sadd.s32 %s74, 1
    %s76 = scalar_select %p73, %s74, %s75
    %p79 = pneg %p73
    %p80 = scmp.eq.s32.totalorder %s24, 1
    %p81 = por %p79, %p80
    %p82 = scmp.ne.s32.totalorder %s74, %s77
    %p83 = scmp.eq.s32.totalorder %s24, 0
    %p84 = por %p82, %p83
    %p85 = scmp.ne.s32.totalorder %s74, %s77
    %p86 = scmp.eq.s32.totalorder %s29, 1
    %p87 = por %p85, %p86
    %p88 = scmp.ne.s32.totalorder %s77, %s78
    %p89 = scmp.eq.s32.totalorder %s29, 0
    %p90 = por %p88, %p89
    %p91 = scmp.ne.s32.totalorder %s77, %s78
    %p92 = scmp.eq.s32.totalorder %s30, 1
    %p93 = por %p91, %p92
    %p95 = scmp.ne.s32.totalorder %s78, %s94
    %p96 = scmp.eq.s32.totalorder %s30, 0
    %p97 = por %p95, %p96
    %s99 = sadd.s32 %s98, 1
    %p102 = scmp.eq.s32.totalorder %s24, 1
    %p103 = scmp.ne.s32.totalorder %s98, %s100
    %p104 = scmp.eq.s32.totalorder %s24, 0
    %p105 = por %p103, %p104
    %p106 = scmp.ne.s32.totalorder %s98, %s100
    %p107 = scmp.eq.s32.totalorder %s29, 1
    %p108 = por %p106, %p107
    %p109 = scmp.ne.s32.totalorder %s100, %s101
    %p110 = scmp.eq.s32.totalorder %s29, 0
    %p111 = por %p109, %p110
    %p112 = scmp.ne.s32.totalorder %s100, %s101
    %p113 = scmp.eq.s32.totalorder %s30, 1
    %p114 = por %p112, %p113
    %p116 = scmp.ne.s32.totalorder %s101, %s115
    %p117 = scmp.eq.s32.totalorder %s30, 0
    %p118 = por %p116, %p117
    %s120 = sadd.s32 %s119, 1
    %p123 = scmp.eq.s32.totalorder %s24, 1
    %p124 = scmp.ne.s32.totalorder %s119, %s121
    %p125 = scmp.eq.s32.totalorder %s24, 0
    %p126 = por %p124, %p125
    %p127 = scmp.ne.s32.totalorder %s119, %s121
    %p128 = scmp.eq.s32.totalorder %s29, 1
    %p129 = por %p127, %p128
    %p130 = scmp.ne.s32.totalorder %s121, %s122
    %p131 = scmp.eq.s32.totalorder %s29, 0
    %p132 = por %p130, %p131
    %p133 = scmp.ne.s32.totalorder %s121, %s122
    %p134 = scmp.eq.s32.totalorder %s30, 1
    %p135 = por %p133, %p134
    %p137 = scmp.ne.s32.totalorder %s122, %s136
    %p138 = scmp.eq.s32.totalorder %s30, 0
    %p139 = por %p137, %p138
    %s141 = sadd.s32 %s140, 1
    %p144 = scmp.eq.s32.totalorder %s24, 1
    %p145 = scmp.ne.s32.totalorder %s140, %s142
    %p146 = scmp.eq.s32.totalorder %s24, 0
    %p147 = por %p145, %p146
    %p148 = scmp.ne.s32.totalorder %s140, %s142
    %p149 = scmp.eq.s32.totalorder %s29, 1
    %p150 = por %p148, %p149
    %p151 = scmp.ne.s32.totalorder %s142, %s143
    %p152 = scmp.eq.s32.totalorder %s29, 0
    %p153 = por %p151, %p152
    %p154 = scmp.ne.s32.totalorder %s142, %s143
    %p155 = scmp.eq.s32.totalorder %s30, 1
    %p156 = por %p154, %p155
    %p158 = scmp.ne.s32.totalorder %s143, %s157
    %p159 = scmp.eq.s32.totalorder %s30, 0
    %p160 = por %p158, %p159
    %s162 = sadd.s32 %s161, 1
    %p165 = scmp.eq.s32.totalorder %s24, 1
    %p166 = scmp.ne.s32.totalorder %s161, %s163
    %p167 = scmp.eq.s32.totalorder %s24, 0
    %p168 = por %p166, %p167
    %p169 = scmp.ne.s32.totalorder %s161, %s163
    %p170 = scmp.eq.s32.totalorder %s29, 1
    %p171 = por %p169, %p170
    %p172 = scmp.ne.s32.totalorder %s163, %s164
    %p173 = scmp.eq.s32.totalorder %s29, 0
    %p174 = por %p172, %p173
    %p175 = scmp.ne.s32.totalorder %s163, %s164
    %p176 = scmp.eq.s32.totalorder %s30, 1
    %p177 = por %p175, %p176
    %p179 = scmp.ne.s32.totalorder %s164, %s178
    %p180 = scmp.eq.s32.totalorder %s30, 0
    %p181 = por %p179, %p180
    %s183 = sadd.s32 %s182, 1
    %p186 = scmp.eq.s32.totalorder %s24, 1
    %p187 = scmp.ne.s32.totalorder %s182, %s184
    %p188 = scmp.eq.s32.totalorder %s24, 0
    %p189 = por %p187, %p188
    %p190 = scmp.ne.s32.totalorder %s182, %s184
    %p191 = scmp.eq.s32.totalorder %s29, 1
    %p192 = por %p190, %p191
    %p193 = scmp.ne.s32.totalorder %s184, %s185
    %p194 = scmp.eq.s32.totalorder %s29, 0
    %p195 = por %p193, %p194
    %p196 = scmp.ne.s32.totalorder %s184, %s185
    %p197 = scmp.eq.s32.totalorder %s30, 1
    %p198 = por %p196, %p197
    %p200 = scmp.ne.s32.totalorder %s185, %s199
    %p201 = scmp.eq.s32.totalorder %s30, 0
    %p202 = por %p200, %p201
    %s204 = sadd.s32 %s203, 1
    %p207 = scmp.eq.s32.totalorder %s24, 1
    %p208 = scmp.ne.s32.totalorder %s203, %s205
    %p209 = scmp.eq.s32.totalorder %s24, 0
    %p210 = por %p208, %p209
    %p211 = scmp.ne.s32.totalorder %s203, %s205
    %p212 = scmp.eq.s32.totalorder %s29, 1
    %p213 = por %p211, %p212
    %p214 = scmp.ne.s32.totalorder %s205, %s206
    %p215 = scmp.eq.s32.totalorder %s29, 0
    %p216 = por %p214, %p215
    %p217 = scmp.ne.s32.totalorder %s205, %s206
    %p218 = scmp.eq.s32.totalorder %s30, 1
    %p219 = por %p217, %p218
    %p221 = scmp.ne.s32.totalorder %s206, %s220
    %p222 = scmp.eq.s32.totalorder %s30, 0
    %p223 = por %p221, %p222
    %s225 = sadd.s32 %s224, 1
    %p228 = scmp.eq.s32.totalorder %s24, 1
    %p229 = scmp.ne.s32.totalorder %s224, %s226
    %p230 = scmp.eq.s32.totalorder %s24, 0
    %p231 = por %p229, %p230
    %p232 = scmp.ne.s32.totalorder %s224, %s226
    %p233 = scmp.eq.s32.totalorder %s29, 1
    %p234 = por %p232, %p233
    %p235 = scmp.ne.s32.totalorder %s226, %s227
    %p236 = scmp.eq.s32.totalorder %s29, 0
    %p237 = por %p235, %p236
    %p238 = scmp.ne.s32.totalorder %s226, %s227
    %p239 = scmp.eq.s32.totalorder %s30, 1
    %p240 = por %p238, %p239
    %p242 = scmp.ne.s32.totalorder %s227, %s241
    %p243 = scmp.eq.s32.totalorder %s30, 0
    %p244 = por %p242, %p243
    %s245 = ssub.s32 %s31, %s43
    %s246 = ssub.s32 %s32, %s39
    %s247 = sor.u32 %s245, %s246
    %p248 = scmp.eq.s32.totalorder %s247, 0
    %s250 = sadd.s32 %s249, 1
    %s251 = scalar_select %p248, %s249, %s250
    %p254 = pneg %p248
    %p255 = scmp.eq.s32.totalorder %s24, 1
    %p256 = por %p254, %p255
    %p257 = scmp.ne.s32.totalorder %s249, %s252
    %p258 = scmp.eq.s32.totalorder %s24, 0
    %p259 = por %p257, %p258
    %p260 = scmp.ne.s32.totalorder %s249, %s252
    %p261 = scmp.eq.s32.totalorder %s29, 1
    %p262 = por %p260, %p261
    %p263 = scmp.ne.s32.totalorder %s252, %s253
    %p264 = scmp.eq.s32.totalorder %s29, 0
    %p265 = por %p263, %p264
    %p266 = scmp.ne.s32.totalorder %s252, %s253
    %p267 = scmp.eq.s32.totalorder %s30, 1
    %p268 = por %p266, %p267
    %p270 = scmp.ne.s32.totalorder %s253, %s269
    %p271 = scmp.eq.s32.totalorder %s30, 0
    %p272 = por %p270, %p271
    %p273 = scmp.le.s32.totalorder 1, %s24
    %p274 = scmp.lt.s32.totalorder %s24, 3
    %p275 = pnand %p273, %p274
    %p276 = pneg %p275
    // Predicated region
    $region9: #{base_hubert_forward.4} parent=5 // pred_check
      _
    $region10: #{base_hubert_forward.4} parent=5 // pred_check_branch
      %278 = sbr.rel (%p275) target = $region12
    $region11: #{base_hubert_forward.4} parent=5 // pred_region
      %s279 = ssub.s32 %s24, 1
      // Predicated region
      $region13: #{base_hubert_forward.4} parent=11 // pred_check
        %p280 = pneg %p111
      $region14: #{base_hubert_forward.4} parent=11 // pred_check_branch
        %282 = sbr.rel (%p280) target = $region16
      $region15: #{base_hubert_forward.4} parent=11 // pred_region
        _
      $region16: #{base_hubert_forward.4} parent=11 // pred_fallthru
        _
      // Predicated region
      $region17: #{base_hubert_forward.4} parent=11 // pred_check
        %p283 = pneg %p132
      $region18: #{base_hubert_forward.4} parent=11 // pred_check_branch
        %285 = sbr.rel (%p283) target = $region20
      $region19: #{base_hubert_forward.4} parent=11 // pred_region
        _
      $region20: #{base_hubert_forward.4} parent=11 // pred_fallthru
        _
      // Predicated region
      $region21: #{base_hubert_forward.4} parent=11 // pred_check
        %p286 = pneg %p153
      $region22: #{base_hubert_forward.4} parent=11 // pred_check_branch
        %288 = sbr.rel (%p286) target = $region24
      $region23: #{base_hubert_forward.4} parent=11 // pred_region
        _
      $region24: #{base_hubert_forward.4} parent=11 // pred_fallthru
        _
      // Predicated region
      $region25: #{base_hubert_forward.4} parent=11 // pred_check
        %p289 = pneg %p174
      $region26: #{base_hubert_forward.4} parent=11 // pred_check_branch
        %291 = sbr.rel (%p289) target = $region28
      $region27: #{base_hubert_forward.4} parent=11 // pred_region
        _
      $region28: #{base_hubert_forward.4} parent=11 // pred_fallthru
        _
      // Predicated region
      $region29: #{base_hubert_forward.4} parent=11 // pred_check
        %p292 = pneg %p195
      $region30: #{base_hubert_forward.4} parent=11 // pred_check_branch
        %294 = sbr.rel (%p292) target = $region32
      $region31: #{base_hubert_forward.4} parent=11 // pred_region
        _
      $region32: #{base_hubert_forward.4} parent=11 // pred_fallthru
        _
      // Predicated region
      $region33: #{base_hubert_forward.4} parent=11 // pred_check
        %p295 = pneg %p216
      $region34: #{base_hubert_forward.4} parent=11 // pred_check_branch
        %297 = sbr.rel (%p295) target = $region36
      $region35: #{base_hubert_forward.4} parent=11 // pred_region
        _
      $region36: #{base_hubert_forward.4} parent=11 // pred_fallthru
        _
      // Predicated region
      $region37: #{base_hubert_forward.4} parent=11 // pred_check
        %p298 = pneg %p237
      $region38: #{base_hubert_forward.4} parent=11 // pred_check_branch
        %300 = sbr.rel (%p298) target = $region40
      $region39: #{base_hubert_forward.4} parent=11 // pred_region
        _
      $region40: #{base_hubert_forward.4} parent=11 // pred_fallthru
        _
    $region12: #{base_hubert_forward.4} parent=5 // pred_fallthru
      _
    %p301 = scmp.lt.s32.totalorder %s24, 2
    // Predicated region
    $region41: #{base_hubert_forward.4} parent=5 // pred_check
      %p302 = pneg %p301
    $region42: #{base_hubert_forward.4} parent=5 // pred_check_branch
      %304 = sbr.rel (%p302) target = $region44
    $region43: #{base_hubert_forward.4} parent=5 // pred_region
      // Predicated region
      $region45: #{base_hubert_forward.4} parent=43 // pred_check
        %p305 = pneg %p58
      $region46: #{base_hubert_forward.4} parent=43 // pred_check_branch
        %307 = sbr.rel (%p305) target = $region48
      $region47: #{base_hubert_forward.4} parent=43 // pred_region
        %p308 = scmp.lt.s32.totalorder %s31, 1
        %s309 = scalar_select %p308, %s31, 1
        %p310 = scmp.lt.s32.totalorder %s32, 0
        %s311 = scalar_select %p310, %s32, 0
        %s312 = smul.addr %s311, 2
        %s313 = smul.addr %s309, 2
        %s314 = sadd.s32 %s312, %s313
        %s315 = smul.addr %s314, 4
        %s316 = scalar_lea.vmem %s1, %s315
      $region48: #{base_hubert_forward.4} parent=43 // pred_fallthru
        _
      // Predicated region
      $region49: #{base_hubert_forward.4} parent=43 // pred_check
        %p317 = pneg %p84
      $region50: #{base_hubert_forward.4} parent=43 // pred_check_branch
        %319 = sbr.rel (%p317) target = $region52
      $region51: #{base_hubert_forward.4} parent=43 // pred_region
        %p320 = scmp.lt.s32.totalorder %s31, 1
        %s321 = scalar_select %p320, %s31, 1
        %s322 = scalar_lea.vmem %s2, %s321
      $region52: #{base_hubert_forward.4} parent=43 // pred_fallthru
        _
    $region44: #{base_hubert_forward.4} parent=5 // pred_fallthru
      _
    %p323 = scmp.le.s32.totalorder 1, %s24
    %p324 = scmp.lt.s32.totalorder %s24, 3
    %p325 = pnand %p323, %p324
    %p326 = pneg %p325
    // Predicated region
    $region53: #{base_hubert_forward.4} parent=5 // pred_check
      _
    $region54: #{base_hubert_forward.4} parent=5 // pred_check_branch
      %328 = sbr.rel (%p325) target = $region56
    $region55: #{base_hubert_forward.4} parent=5 // pred_region
      %s329 = ssub.s32 %s24, 1
      %p330 = scmp.lt.s32.totalorder %s33, 1
      %s331 = scalar_select %p330, %s33, 1
      %p332 = scmp.lt.s32.totalorder %s34, 0
      %s333 = scalar_select %p332, %s34, 0
      %s334 = smul.addr %s333, 2
      %s335 = smul.addr %s331, 2
      %s336 = sadd.s32 %s334, %s335
      %s337 = smul.addr %s336, 4
      %s338 = scalar_lea.vmem %s1, %s337
      %p339 = pneg %p64
      %p340 = pneg %p61
      %p341 = scmp.lt.s32.totalorder %s33, 1
      %s342 = scalar_select %p341, %s33, 1
      %s343 = scalar_lea.vmem %s2, %s342
      %p344 = pneg %p90
      %p345 = pneg %p87
      %p346 = pneg %p111
      %p347 = pneg %p108
      %p348 = pneg %p132
      %p349 = pneg %p129
      %p350 = pneg %p153
      %p351 = pneg %p150
      %p352 = pneg %p174
      %p353 = pneg %p171
      %p354 = pneg %p195
      %p355 = pneg %p192
      %p356 = pneg %p216
      %p357 = pneg %p213
      %p358 = pneg %p237
      %p359 = pneg %p234
      %p360 = pneg %p265
      %p361 = pneg %p262
      %p362 = scmp.lt.s32.totalorder %s33, 1
      %s363 = scalar_select %p362, %s33, 1
      %p364 = scmp.lt.s32.totalorder %s34, 0
      %s365 = scalar_select %p364, %s34, 0
      %s366 = sadd.s32 %s365, %s363
      %s367 = smul.addr %s366, 4
      %s368 = scalar_lea.vmem %s10, %s367
      %p369 = scmp.lt.s32.totalorder %s33, 1
      %s370 = scalar_select %p369, %s33, 1
      %p371 = scmp.lt.s32.totalorder %s34, 0
      %s372 = scalar_select %p371, %s34, 0
      %s373 = smul.addr %s372, 2
      %s374 = smul.addr %s370, 2
      %s375 = sadd.s32 %s373, %s374
      %s376 = smul.addr %s375, 4
      %s377 = scalar_lea.vmem %s1, %s376
      %p378 = scmp.lt.s32.totalorder %s33, 1
      %s379 = scalar_select %p378, %s33, 1
      %s380 = scalar_lea.vmem %s2, %s379
      %p381 = scmp.lt.s32.totalorder %s33, 1
      %s382 = scalar_select %p381, %s33, 1
      %p383 = scmp.lt.s32.totalorder %s34, 0
      %s384 = scalar_select %p383, %s34, 0
      %s385 = sadd.s32 %s384, %s382
      %s386 = smul.addr %s385, 4
      %s387 = scalar_lea.vmem %s10, %s386
      %v389 = vld [vmem:[%s377] sm:$0xff]
      %v390 = vld [vmem:[%s3] sm:$0xf]
      %v391 = vld [vmem:[%s3 + $0x4] sm:$0xf]
      %v392 = vld [vmem:[%s3 + $0x8] sm:$0xf]
      %v393 = vld [vmem:[%s3 + $0xc] sm:$0xf]
      %v394 = vld [vmem:[%s3 + $0x10] sm:$0xf]
      %v395 = vld [vmem:[%s3 + $0x14] sm:$0xf]
      %v396 = vld [vmem:[%s3 + $0x18] sm:$0xf]
      %v397 = vld [vmem:[%s3 + $0x1c] sm:$0xf]
      %v398 = vld [vmem:[%s3 + $0x20] sm:$0xf]
      %v399 = vld [vmem:[%s3 + $0x24] sm:$0xf]
      %v400 = vld [vmem:[%s3 + $0x28] sm:$0xf]
      %v401 = vld [vmem:[%s3 + $0x2c] sm:$0xf]
      %v402 = vld [vmem:[%s3 + $0x30] sm:$0xf]
      %v403 = vld [vmem:[%s3 + $0x34] sm:$0xf]
      %v404 = vld [vmem:[%s3 + $0x38] sm:$0xf]
      %v405 = vld [vmem:[%s3 + $0x3c] sm:$0xf]
      %v406 = vld [vmem:[%s3 + $0x40] sm:$0xf]
      %v407 = vld [vmem:[%s3 + $0x44] sm:$0xf]
      %v408 = vld [vmem:[%s3 + $0x48] sm:$0xf]
      %v409 = vld [vmem:[%s3 + $0x4c] sm:$0xf]
      %v410 = vld [vmem:[%s3 + $0x50] sm:$0xf]
      %v411 = vld [vmem:[%s3 + $0x54] sm:$0xf]
      %v412 = vld [vmem:[%s3 + $0x58] sm:$0xf]
      %v413 = vld [vmem:[%s3 + $0x5c] sm:$0xf]
      %v414 = vld [vmem:[%s3 + $0x60] sm:$0xf]
      %v415 = vld [vmem:[%s3 + $0x64] sm:$0xf]
      %v416 = vld [vmem:[%s3 + $0x68] sm:$0xf]
      %v417 = vld [vmem:[%s3 + $0x6c] sm:$0xf]
      %v418 = vld [vmem:[%s3 + $0x70] sm:$0xf]
      %v419 = vld [vmem:[%s3 + $0x74] sm:$0xf]
      %v420 = vld [vmem:[%s3 + $0x78] sm:$0xf]
      %v421 = vld [vmem:[%s3 + $0x7c] sm:$0xf]
      %v422 = vld [vmem:[%s4] sm:$0x1]
      %v424 = vperm.slane %v422, 0
      %v427 = vunpack.c.l.b16 %v389
      %v428 = vunpack.c.h.b16 %v389
      %v429 = vpack.c.b16 %v427, %v427
      %v430 = vpack.c.b16 %v428, %v428
      %v465 = vunpack.c.l.b16 %v390
      %v466 = vunpack.c.l.b16 %v391
      %v467 = vunpack.c.l.b16 %v392
      %v468 = vunpack.c.l.b16 %v393
      %v469 = vunpack.c.l.b16 %v394
      %v470 = vunpack.c.l.b16 %v395
      %v471 = vunpack.c.l.b16 %v396
      %v472 = vunpack.c.l.b16 %v397
      %v473 = vunpack.c.l.b16 %v398
      %v474 = vunpack.c.l.b16 %v399
      %v475 = vunpack.c.l.b16 %v400
      %v476 = vunpack.c.l.b16 %v401
      %v477 = vunpack.c.l.b16 %v402
      %v478 = vunpack.c.l.b16 %v403
      %v479 = vunpack.c.l.b16 %v404
      %v480 = vunpack.c.l.b16 %v405
      %v481 = vunpack.c.l.b16 %v406
      %v482 = vunpack.c.l.b16 %v407
      %v483 = vunpack.c.l.b16 %v408
      %v484 = vunpack.c.l.b16 %v409
      %v485 = vunpack.c.l.b16 %v410
      %v486 = vunpack.c.l.b16 %v411
      %v487 = vunpack.c.l.b16 %v412
      %v488 = vunpack.c.l.b16 %v413
      %v489 = vunpack.c.l.b16 %v414
      %v490 = vunpack.c.l.b16 %v415
      %v491 = vunpack.c.l.b16 %v416
      %v492 = vunpack.c.l.b16 %v417
      %v493 = vunpack.c.l.b16 %v418
      %v494 = vunpack.c.l.b16 %v419
      %v495 = vunpack.c.l.b16 %v420
      %v496 = vunpack.c.l.b16 %v421
      %v497 = vpack.c.b16 %v466, %v465
      %v498 = vpack.c.b16 %v468, %v467
      %v499 = vpack.c.b16 %v470, %v469
      %v500 = vpack.c.b16 %v472, %v471
      %v501 = vpack.c.b16 %v474, %v473
      %v502 = vpack.c.b16 %v476, %v475
      %v503 = vpack.c.b16 %v478, %v477
      %v504 = vpack.c.b16 %v480, %v479
      %v505 = vpack.c.b16 %v482, %v481
      %v506 = vpack.c.b16 %v484, %v483
      %v507 = vpack.c.b16 %v486, %v485
      %v508 = vpack.c.b16 %v488, %v487
      %v509 = vpack.c.b16 %v490, %v489
      %v510 = vpack.c.b16 %v492, %v491
      %v511 = vpack.c.b16 %v494, %v493
      %v512 = vpack.c.b16 %v496, %v495
      %529 = vmatpush.bf16.msra.mxu0 %v504
      %530 = vmatpush.bf16.msra.mxu0 %v503
      %531 = vmatpush.bf16.msra.mxu0 %v502
      %532 = vmatpush.bf16.msra.mxu0 %v501
      %533 = vmatpush.bf16.msra.mxu0 %v500
      %534 = vmatpush.bf16.msra.mxu0 %v499
      %535 = vmatpush.bf16.msra.mxu0 %v498
      %536 = vmatpush.bf16.msra.mxu0 %v497
      %537 = vmatmul.bf16.gmra.mxu0 %v429
      %v538 = vpop.f32.mrf.mxu0
      %v539 = vadd.f32 %v424, %v538
      %v540 = vpop.f32.mrf.mxu0
      %541 = vdwg.mxu0
      %542 = vmatpush.bf16.msra.mxu0 %v512
      %543 = vmatpush.bf16.msra.mxu0 %v511
      %544 = vmatpush.bf16.msra.mxu0 %v510
      %545 = vmatpush.bf16.msra.mxu0 %v509
      %546 = vmatpush.bf16.msra.mxu0 %v508
      %547 = vmatpush.bf16.msra.mxu0 %v507
      %548 = vmatpush.bf16.msra.mxu0 %v506
      %549 = vmatpush.bf16.msra.mxu0 %v505
      %550 = vmatmul.bf16.gmra.mxu0 %v430
      %v551 = vpop.f32.mrf.mxu0
      %v552 = vadd.f32 %v539, %v551
      %v553 = vpop.f32.mrf.mxu0
      %554 = vdwg.mxu0
      %v555 = vmax.f32 %v552, 0.0
      %s556 = sld [smem:[#allocation3 + %s33]]
      %s557 = smul.u32 %s34, 8
      %v558 = vlaneseq
      %v559 = vshrl.u32 %v558, 7
      %v560 = vstv %s557
      %v561 = vadd.s32 %v560, %v559
      %v562 = vstv %s556
      %vm563 = vcmp.le.s32.totalorder %v561, %v562
      %v564 = vsel %vm563, 1, 0
      %v565 = vcvt.s32.f32 %v564
      %v566 = vmul.f32 %v555, %v565
      %v567 = vpack.c.bf16 %v566, %v566
      %v568 = vld [vmem:[%s5] sm:$0xf]
      %v569 = vld [vmem:[%s5 + $0x4] sm:$0xf]
      %v570 = vld [vmem:[%s5 + $0x8] sm:$0xf]
      %v571 = vld [vmem:[%s5 + $0xc] sm:$0xf]
      %v572 = vld [vmem:[%s5 + $0x10] sm:$0xf]
      %v573 = vld [vmem:[%s5 + $0x14] sm:$0xf]
      %v574 = vld [vmem:[%s5 + $0x18] sm:$0xf]
      %v575 = vld [vmem:[%s5 + $0x1c] sm:$0xf]
      %v576 = vld [vmem:[%s5 + $0x20] sm:$0xf]
      %v577 = vld [vmem:[%s6] sm:$0x1]
      %v579 = vperm.slane %v577, 0
      %v590 = vunpack.c.l.b16 %v568
      %v591 = vunpack.c.l.b16 %v569
      %v592 = vunpack.c.l.b16 %v570
      %v593 = vunpack.c.l.b16 %v571
      %v594 = vunpack.c.l.b16 %v572
      %v595 = vunpack.c.l.b16 %v573
      %v596 = vunpack.c.l.b16 %v574
      %v597 = vunpack.c.l.b16 %v575
      %v598 = vunpack.c.l.b16 %v576
      %v599 = vpack.c.b16 %v591, %v590
      %v600 = vpack.c.b16 %v593, %v592
      %v601 = vpack.c.b16 %v595, %v594
      %v602 = vpack.c.b16 %v597, %v596
      %v603 = vpack.c.b16 %v598, %v598
      %vm608 = vcmask 588800
      %v610 = vsel %vm608, %v567, 0
      %vm612 = vcmask 1043456
      %v614 = vsel %vm612, %v603, 0
      %616 = vmatpush.bf16.msra.mxu0 0
      %617 = vmatpush.bf16.msra.mxu0 0
      %618 = vmatpush.bf16.msra.mxu0 0
      %619 = vmatpush.bf16.msra.mxu0 %v614
      %620 = vmatpush.bf16.msra.mxu0 %v602
      %621 = vmatpush.bf16.msra.mxu0 %v601
      %622 = vmatpush.bf16.msra.mxu0 %v600
      %623 = vmatpush.bf16.msra.mxu0 %v599
      %624 = vmatmul.bf16.gmra.mxu0 %v610
      %v625 = vpop.f32.mrf.mxu0
      %v626 = vadd.f32 %v579, %v625
      %v627 = vpop.f32.mrf.mxu0
      %628 = vdwg.mxu0
      %v629 = vld [vmem:[%s380] sm:$0x1]
      %v630 = vld [vmem:[%s8] sm:$0xf]
      %v631 = vld [vmem:[%s8 + $0x4] sm:$0xf]
      %v634 = vunpack.c.l.b16 %v630
      %v635 = vunpack.c.l.b16 %v631
      %v636 = vpack.c.b16 %v635, %v634
      %vm638 = vcmask 130048
      %v640 = vsel %vm638, %v629, 0
      %642 = vmatpush.bf16.msra.mxu0 0
      %643 = vmatpush.bf16.msra.mxu0 0
      %644 = vmatpush.bf16.msra.mxu0 0
      %645 = vmatpush.bf16.msra.mxu0 0
      %646 = vmatpush.bf16.msra.mxu0 0
      %647 = vmatpush.bf16.msra.mxu0 0
      %648 = vmatpush.bf16.msra.mxu0 0
      %649 = vmatpush.bf16.msra.mxu0 %v636
      %650 = vmatmul.bf16.gmra.mxu0 %v640
      %v651 = vpop.f32.mrf.mxu0
      %v652 = vadd.f32 0.0, %v651
      %v653 = vpop.f32.mrf.mxu0
      %654 = vdwg.mxu0
      %v655 = vpack.c.bf16 %v626, %v626
      %v656 = vld [vmem:[%s7] sm:$0xf]
      %v657 = vld [vmem:[%s7 + $0x4] sm:$0xf]
      %v658 = vld [vmem:[%s7 + $0x8] sm:$0xf]
      %v659 = vld [vmem:[%s7 + $0xc] sm:$0xf]
      %v660 = vperm.slane %v652, 0
      %v665 = vunpack.c.l.b16 %v656
      %v666 = vunpack.c.l.b16 %v657
      %v667 = vunpack.c.l.b16 %v658
      %v668 = vunpack.c.l.b16 %v659
      %v669 = vpack.c.b16 %v666, %v665
      %v670 = vpack.c.b16 %v668, %v667
      %vm673 = vcmask 261120
      %v675 = vsel %vm673, %v655, 0
      %677 = vmatpush.bf16.msra.mxu0 0
      %678 = vmatpush.bf16.msra.mxu0 0
      %679 = vmatpush.bf16.msra.mxu0 0
      %680 = vmatpush.bf16.msra.mxu0 0
      %681 = vmatpush.bf16.msra.mxu0 0
      %682 = vmatpush.bf16.msra.mxu0 0
      %683 = vmatpush.bf16.msra.mxu0 %v670
      %684 = vmatpush.bf16.msra.mxu0 %v669
      %685 = vmatmul.bf16.gmra.mxu0 %v675
      %v686 = vpop.f32.mrf.mxu0
      %v687 = vadd.f32 %v660, %v686
      %v688 = vpop.f32.mrf.mxu0
      %689 = vdwg.mxu0
      %v690 = vld [vmem:[%s9] sm:$0x1]
      %v692 = vperm.slane %v690, 0
      %v694 = vadd.f32 %v687, %v692
      %v695 = vpack.c.bf16 %v694, %v694
      %vm696 = vcmask 257024
      %697 = vst.msk [vmem:[%s387] sm:$0xf] %vm696, %v695
      %p698 = scmp.lt.s32.totalorder %s33, 1
      %s699 = scalar_select %p698, %s33, 1
      %p700 = scmp.lt.s32.totalorder %s34, 0
      %s701 = scalar_select %p700, %s34, 0
      %s702 = sadd.s32 %s701, %s699
      %s703 = smul.addr %s702, 4
      %s704 = scalar_lea.vmem %s10, %s703
      // Predicated region
      $region57: #{base_hubert_forward.4} parent=55 // pred_check
        %p705 = pneg %p262
      $region58: #{base_hubert_forward.4} parent=55 // pred_check_branch
        %707 = sbr.rel (%p705) target = $region60
      $region59: #{base_hubert_forward.4} parent=55 // pred_region
        _
      $region60: #{base_hubert_forward.4} parent=55 // pred_fallthru
        _
    $region56: #{base_hubert_forward.4} parent=5 // pred_fallthru
      _
    %p708 = scmp.le.s32.totalorder 2, %s24
    // Predicated region
    $region61: #{base_hubert_forward.4} parent=5 // pred_check
      %p709 = pneg %p708
    $region62: #{base_hubert_forward.4} parent=5 // pred_check_branch
      %711 = sbr.rel (%p709) target = $region64
    $region63: #{base_hubert_forward.4} parent=5 // pred_region
      %s712 = ssub.s32 %s24, 2
      // Predicated region
      $region65: #{base_hubert_forward.4} parent=63 // pred_check
        %p713 = pneg %p268
      $region66: #{base_hubert_forward.4} parent=63 // pred_check_branch
        %715 = sbr.rel (%p713) target = $region68
      $region67: #{base_hubert_forward.4} parent=63 // pred_region
        %p716 = scmp.lt.s32.totalorder %s35, 1
        %s717 = scalar_select %p716, %s35, 1
        %p718 = scmp.lt.s32.totalorder %s36, 0
        %s719 = scalar_select %p718, %s36, 0
        %s720 = sadd.s32 %s719, %s717
        %s721 = smul.addr %s720, 4
        %s722 = scalar_lea.vmem %s10, %s721
      $region68: #{base_hubert_forward.4} parent=63 // pred_fallthru
        _
    $region64: #{base_hubert_forward.4} parent=5 // pred_fallthru
      _
  $region6: #{base_hubert_forward.4} parent=0 // loop_footer
    %s28 = sadd.s32 1, %s24
  $region7: #{base_hubert_forward.4} parent=0 // loop_footer_branch
    %23 = sbr.rel target = $region3
  $region8: #{base_hubert_forward.4} parent=0 // loop_exit
    _

// kernel: base_hubert_forward.7
$region0: #{base_hubert_forward.7}
  #allocation0 [shape = 'u32[]', space=smem, size = 0x4, offset = 0x4, fixed_abs, tag = 'smem constant byte address 0x4 - core index']
  #allocation1 [shape = 'u32[72,128]{1,0:T(1,128)}', space=vmem, size = 0x9000, scoped, tag = 'internal scratch']
  %s0 = inlined_call_operand.vmem [shape: bf16[16,48], index: 0, kind: input, shape index: {}]
  %s1 = inlined_call_operand.vmem [shape: bf16[48,48], index: 1, kind: input, shape index: {}]
  %s2 = inlined_call_operand.vmem [shape: f32[1,48], index: 2, kind: input, shape index: {}]
  %s3 = inlined_call_operand.vmem [shape: bf16[32,64], index: 3, kind: input, shape index: {}]
  %s4 = inlined_call_operand.vmem [shape: f32[1,64], index: 4, kind: input, shape index: {}]
  %s5 = inlined_call_operand.vmem [shape: bf16[64,48], index: 5, kind: input, shape index: {}]
  %s6 = inlined_call_operand.vmem [shape: f32[1,48], index: 6, kind: input, shape index: {}]
  %s7 = inlined_call_operand.vmem [shape: f32[16,48], index: 7, kind: output, shape index: {0}]
  %s8 = inlined_call_operand.vmem [shape: f32[16,48], index: 8, kind: output, shape index: {1}]
  %9 = xla_tuple %s7, %s8
  %s10 = sld [smem:[#allocation0]]
  $region46: #{base_hubert_forward.7} parent=0
    _
  %s12 = ssub.s32 1, %s10
  %s13 = scalar_select 0, %s12, %s10
  // Predicated region
  $region2: #{base_hubert_forward.7} parent=0 // pred_check
    _
  $region3: #{base_hubert_forward.7} parent=0 // pred_check_branch
    %15 = sbr.rel (0) target = $region5
  $region4: #{base_hubert_forward.7} parent=0 // pred_region
    _
  $region5: #{base_hubert_forward.7} parent=0 // pred_fallthru
    _
  // Predicated region
  $region6: #{base_hubert_forward.7} parent=0 // pred_check
    _
  $region7: #{base_hubert_forward.7} parent=0 // pred_check_branch
    %17 = sbr.rel (0) target = $region9
  $region8: #{base_hubert_forward.7} parent=0 // pred_region
    _
  $region9: #{base_hubert_forward.7} parent=0 // pred_fallthru
    _
  // Predicated region
  $region10: #{base_hubert_forward.7} parent=0 // pred_check
    _
  $region11: #{base_hubert_forward.7} parent=0 // pred_check_branch
    %19 = sbr.rel (0) target = $region13
  $region12: #{base_hubert_forward.7} parent=0 // pred_region
    _
  $region13: #{base_hubert_forward.7} parent=0 // pred_fallthru
    _
  // Predicated region
  $region14: #{base_hubert_forward.7} parent=0 // pred_check
    _
  $region15: #{base_hubert_forward.7} parent=0 // pred_check_branch
    %21 = sbr.rel (0) target = $region17
  $region16: #{base_hubert_forward.7} parent=0 // pred_region
    _
  $region17: #{base_hubert_forward.7} parent=0 // pred_fallthru
    _
  // Predicated region
  $region18: #{base_hubert_forward.7} parent=0 // pred_check
    _
  $region19: #{base_hubert_forward.7} parent=0 // pred_check_branch
    %23 = sbr.rel (0) target = $region21
  $region20: #{base_hubert_forward.7} parent=0 // pred_region
    _
  $region21: #{base_hubert_forward.7} parent=0 // pred_fallthru
    _
  // Predicated region
  $region22: #{base_hubert_forward.7} parent=0 // pred_check
    _
  $region23: #{base_hubert_forward.7} parent=0 // pred_check_branch
    %25 = sbr.rel (0) target = $region25
  $region24: #{base_hubert_forward.7} parent=0 // pred_region
    _
  $region25: #{base_hubert_forward.7} parent=0 // pred_fallthru
    _
  // Predicated region
  $region26: #{base_hubert_forward.7} parent=0 // pred_check
    _
  $region27: #{base_hubert_forward.7} parent=0 // pred_check_branch
    %27 = sbr.rel (0) target = $region29
  $region28: #{base_hubert_forward.7} parent=0 // pred_region
    _
  $region29: #{base_hubert_forward.7} parent=0 // pred_fallthru
    _
  %v29 = vld [vmem:[%s0] sm:$0xf]
  %v30 = vld [vmem:[%s0 + $0x4] sm:$0xf]
  %v31 = vld [vmem:[%s1] sm:$0xf]
  %v32 = vld [vmem:[%s1 + $0x4] sm:$0xf]
  %v33 = vld [vmem:[%s1 + $0x8] sm:$0xf]
  %v34 = vld [vmem:[%s1 + $0xc] sm:$0xf]
  %v35 = vld [vmem:[%s1 + $0x10] sm:$0xf]
  %v36 = vld [vmem:[%s1 + $0x14] sm:$0xf]
  %v37 = vld [vmem:[%s2] sm:$0x1]
  %v39 = vperm.slane %v37, 0
  %v43 = vunpack.c.l.b16 %v29
  %v44 = vunpack.c.l.b16 %v30
  %v45 = vpack.c.b16 %v44, %v43
  %v52 = vunpack.c.l.b16 %v31
  %v53 = vunpack.c.l.b16 %v32
  %v54 = vunpack.c.l.b16 %v33
  %v55 = vunpack.c.l.b16 %v34
  %v56 = vunpack.c.l.b16 %v35
  %v57 = vunpack.c.l.b16 %v36
  %v58 = vpack.c.b16 %v53, %v52
  %v59 = vpack.c.b16 %v55, %v54
  %v60 = vpack.c.b16 %v57, %v56
  %vm64 = vcmask 392192
  %v66 = vsel %vm64, %v45, 0
  %68 = vmatpush.bf16.msra.mxu0 0
  %69 = vmatpush.bf16.msra.mxu0 0
  %70 = vmatpush.bf16.msra.mxu0 0
  %71 = vmatpush.bf16.msra.mxu0 0
  %72 = vmatpush.bf16.msra.mxu0 0
  %73 = vmatpush.bf16.msra.mxu0 %v60
  %74 = vmatpush.bf16.msra.mxu0 %v59
  %75 = vmatpush.bf16.msra.mxu0 %v58
  %76 = vmatmul.bf16.gmra.mxu0 %v66
  %v77 = vpop.f32.mrf.mxu0
  %v78 = vadd.f32 %v39, %v77
  %v79 = vpop.f32.mrf.mxu0
  %v80 = vadd.f32 %v39, %v79
  %81 = vdwg.mxu0
  %82 = vst.msk [vmem:[%s7] sm:$0xff] %vm64, %v78
  %83 = vst.msk [vmem:[%s7 + $0x8] sm:$0xff] %vm64, %v80
  %v84 = vpack.c.bf16 %v80, %v78
  %v85 = vld [vmem:[%s3] sm:$0xf]
  %v86 = vld [vmem:[%s3 + $0x4] sm:$0xf]
  %v87 = vld [vmem:[%s3 + $0x8] sm:$0xf]
  %v88 = vld [vmem:[%s3 + $0xc] sm:$0xf]
  %v89 = vld [vmem:[%s4] sm:$0x1]
  %v91 = vperm.slane %v89, 0
  %v97 = vunpack.c.l.b16 %v85
  %v98 = vunpack.c.l.b16 %v86
  %v99 = vunpack.c.l.b16 %v87
  %v100 = vunpack.c.l.b16 %v88
  %v101 = vpack.c.b16 %v98, %v97
  %v102 = vpack.c.b16 %v100, %v99
  %vm105 = vcmask 261120
  %v107 = vsel %vm105, %v84, 0
  %109 = vmatpush.bf16.msra.mxu0 0
  %110 = vmatpush.bf16.msra.mxu0 0
  %111 = vmatpush.bf16.msra.mxu0 0
  %112 = vmatpush.bf16.msra.mxu0 0
  %113 = vmatpush.bf16.msra.mxu0 0
  %114 = vmatpush.bf16.msra.mxu0 0
  %115 = vmatpush.bf16.msra.mxu0 %v102
  %116 = vmatpush.bf16.msra.mxu0 %v101
  %117 = vmatmul.bf16.gmra.mxu0 %v107
  %v118 = vpop.f32.mrf.mxu0
  %v119 = vadd.f32 %v91, %v118
  %v120 = vpop.f32.mrf.mxu0
  %v121 = vadd.f32 %v91, %v120
  %122 = vdwg.mxu0
  %v123 = vmax.f32 %v119, 0.0
  %v124 = vmax.f32 %v121, 0.0
  %v125 = vpack.c.bf16 %v124, %v123
  %v126 = vld [vmem:[%s5] sm:$0xf]
  %v127 = vld [vmem:[%s5 + $0x4] sm:$0xf]
  %v128 = vld [vmem:[%s5 + $0x8] sm:$0xf]
  %v129 = vld [vmem:[%s5 + $0xc] sm:$0xf]
  %v130 = vld [vmem:[%s5 + $0x10] sm:$0xf]
  %v131 = vld [vmem:[%s5 + $0x14] sm:$0xf]
  %v132 = vld [vmem:[%s5 + $0x18] sm:$0xf]
  %v133 = vld [vmem:[%s5 + $0x1c] sm:$0xf]
  %v134 = vld [vmem:[%s6] sm:$0x1]
  %v136 = vperm.slane %v134, 0
  %v146 = vunpack.c.l.b16 %v126
  %v147 = vunpack.c.l.b16 %v127
  %v148 = vunpack.c.l.b16 %v128
  %v149 = vunpack.c.l.b16 %v129
  %v150 = vunpack.c.l.b16 %v130
  %v151 = vunpack.c.l.b16 %v131
  %v152 = vunpack.c.l.b16 %v132
  %v153 = vunpack.c.l.b16 %v133
  %v154 = vpack.c.b16 %v147, %v146
  %v155 = vpack.c.b16 %v149, %v148
  %v156 = vpack.c.b16 %v151, %v150
  %v157 = vpack.c.b16 %v153, %v152
  %vm162 = vcmask 523264
  %v164 = vsel %vm162, %v125, 0
  %166 = vmatpush.bf16.msra.mxu0 0
  %167 = vmatpush.bf16.msra.mxu0 0
  %168 = vmatpush.bf16.msra.mxu0 0
  %169 = vmatpush.bf16.msra.mxu0 0
  %170 = vmatpush.bf16.msra.mxu0 %v157
  %171 = vmatpush.bf16.msra.mxu0 %v156
  %172 = vmatpush.bf16.msra.mxu0 %v155
  %173 = vmatpush.bf16.msra.mxu0 %v154
  %174 = vmatmul.bf16.gmra.mxu0 %v164
  %v175 = vpop.f32.mrf.mxu0
  %v176 = vadd.f32 %v136, %v175
  %v177 = vpop.f32.mrf.mxu0
  %v178 = vadd.f32 %v136, %v177
  %179 = vdwg.mxu0
  %180 = vst.msk [vmem:[%s8] sm:$0xff] %vm64, %v176
  %181 = vst.msk [vmem:[%s8 + $0x8] sm:$0xff] %vm64, %v178
  // Predicated region
  $region30: #{base_hubert_forward.7} parent=0 // pred_check
    _
  $region31: #{base_hubert_forward.7} parent=0 // pred_check_branch
    %183 = sbr.rel (0) target = $region33
  $region32: #{base_hubert_forward.7} parent=0 // pred_region
    _
  $region33: #{base_hubert_forward.7} parent=0 // pred_fallthru
    _
  // Predicated region
  $region34: #{base_hubert_forward.7} parent=0 // pred_check
    _
  $region35: #{base_hubert_forward.7} parent=0 // pred_check_branch
    %185 = sbr.rel (0) target = $region37
  $region36: #{base_hubert_forward.7} parent=0 // pred_region
    _
  $region37: #{base_hubert_forward.7} parent=0 // pred_fallthru
    _
  // Predicated region
  $region38: #{base_hubert_forward.7} parent=0 // pred_check
    _
  $region39: #{base_hubert_forward.7} parent=0 // pred_check_branch
    %187 = sbr.rel (0) target = $region41
  $region40: #{base_hubert_forward.7} parent=0 // pred_region
    _
  $region41: #{base_hubert_forward.7} parent=0 // pred_fallthru
    _
  // Predicated region
  $region42: #{base_hubert_forward.7} parent=0 // pred_check
    _
  $region43: #{base_hubert_forward.7} parent=0 // pred_check_branch
    %189 = sbr.rel (0) target = $region45
  $region44: #{base_hubert_forward.7} parent=0 // pred_region
    _
  $region45: #{base_hubert_forward.7} parent=0 // pred_fallthru
    _

// kernel: base_hubert_forward.6
$region0: #{base_hubert_forward.6}
  #allocation0 [shape = 'u32[]', space=smem, size = 0x4, offset = 0x4, fixed_abs, tag = 'smem constant byte address 0x4 - core index']
  #allocation1 [shape = 'u32[72,128]{1,0:T(1,128)}', space=vmem, size = 0x9000, scoped, tag = 'internal scratch']
  %s0 = inlined_call_operand.vmem [shape: bf16[2,10,48], index: 0, kind: input, shape index: {}]
  %s1 = inlined_call_operand.vmem [shape: bf16[3,48,20], index: 1, kind: input, shape index: {}]
  %s2 = inlined_call_operand.vmem [shape: f32[1,20], index: 2, kind: input, shape index: {}]
  %s3 = inlined_call_operand.hbm [shape: f32[2,8,20], index: 3, kind: output, shape index: {}]
  %s4 = sld [smem:[#allocation0]]
  $region45: #{base_hubert_forward.6} parent=0
    _
  %s6 = ssub.s32 1, %s4
  %s7 = scalar_select 0, %s6, %s4
  $region1: #{base_hubert_forward.6} parent=0
    #allocation2 [shape = 'u8[8192]{0}', space=vmem, size = 0x2000, scoped, tag = 'output window, operand 0']
    #allocation3 [shape = 's32[2]{0}', space=sflag, size = 0x8, scoped, tag = 'scoped memory for base_hubert_forward.6']
    %8 = vsyncpa [#allocation3], 0
    %s9 = scalar_lea.sflag [#allocation3], 1
    %10 = vsyncpa %s9, 0
    loop: start=0, step=1, limit=4
    $region2: #{base_hubert_forward.6} parent=1 // loop_pre_header
      _
    $region3: #{base_hubert_forward.6} parent=1 // loop_header
      %s12 = sphi 0, %s16
      %p13 = scmp.ge.s32.totalorder %s12, 4
      %s22 = sphi 0, %s24
      %s25 = sphi 0, %s22
      %s26 = sphi 0, %s25
      %s42 = sphi 0, %s26
      %s46 = sphi 0, %s46
      %s48 = sphi 0, %s46
      %s49 = sphi 0, %s48
      %s63 = sphi 0, %s49
      %s67 = sphi 0, %s67
      %s69 = sphi 0, %s67
      %s70 = sphi 0, %s69
      %s84 = sphi 0, %s70
      %s90 = sphi 0, %s92
      %s93 = sphi 0, %s90
      %s94 = sphi 0, %s93
      %s110 = sphi 0, %s94
    $region4: #{base_hubert_forward.6} parent=1 // loop_header_branch
      %15 = sbr.rel (%p13) target = $region8
    $region5: #{base_hubert_forward.6} parent=1 // loop_body
      %s17 = ssub.s32 %s12, 1
      %s18 = ssub.s32 %s12, 2
      %s19 = sadd.s32 %s12, 1
      %s20 = ssub.s32 %s12, %s19
      %p21 = scmp.eq.s32.totalorder %s20, 0
      %s23 = sadd.s32 %s22, 1
      %s24 = scalar_select %p21, %s22, %s23
      %p27 = pneg %p21
      %p28 = scmp.eq.s32.totalorder %s12, 1
      %p29 = por %p27, %p28
      %p30 = scmp.ne.s32.totalorder %s22, %s25
      %p31 = scmp.eq.s32.totalorder %s12, 0
      %p32 = por %p30, %p31
      %p33 = scmp.ne.s32.totalorder %s22, %s25
      %p34 = scmp.eq.s32.totalorder %s17, 1
      %p35 = por %p33, %p34
      %p36 = scmp.ne.s32.totalorder %s25, %s26
      %p37 = scmp.eq.s32.totalorder %s17, 0
      %p38 = por %p36, %p37
      %p39 = scmp.ne.s32.totalorder %s25, %s26
      %p40 = scmp.eq.s32.totalorder %s18, 1
      %p41 = por %p39, %p40
      %p43 = scmp.ne.s32.totalorder %s26, %s42
      %p44 = scmp.eq.s32.totalorder %s18, 0
      %p45 = por %p43, %p44
      %s47 = sadd.s32 %s46, 1
      %p50 = scmp.eq.s32.totalorder %s12, 1
      %p51 = scmp.ne.s32.totalorder %s46, %s48
      %p52 = scmp.eq.s32.totalorder %s12, 0
      %p53 = por %p51, %p52
      %p54 = scmp.ne.s32.totalorder %s46, %s48
      %p55 = scmp.eq.s32.totalorder %s17, 1
      %p56 = por %p54, %p55
      %p57 = scmp.ne.s32.totalorder %s48, %s49
      %p58 = scmp.eq.s32.totalorder %s17, 0
      %p59 = por %p57, %p58
      %p60 = scmp.ne.s32.totalorder %s48, %s49
      %p61 = scmp.eq.s32.totalorder %s18, 1
      %p62 = por %p60, %p61
      %p64 = scmp.ne.s32.totalorder %s49, %s63
      %p65 = scmp.eq.s32.totalorder %s18, 0
      %p66 = por %p64, %p65
      %s68 = sadd.s32 %s67, 1
      %p71 = scmp.eq.s32.totalorder %s12, 1
      %p72 = scmp.ne.s32.totalorder %s67, %s69
      %p73 = scmp.eq.s32.totalorder %s12, 0
      %p74 = por %p72, %p73
      %p75 = scmp.ne.s32.totalorder %s67, %s69
      %p76 = scmp.eq.s32.totalorder %s17, 1
      %p77 = por %p75, %p76
      %p78 = scmp.ne.s32.totalorder %s69, %s70
      %p79 = scmp.eq.s32.totalorder %s17, 0
      %p80 = por %p78, %p79
      %p81 = scmp.ne.s32.totalorder %s69, %s70
      %p82 = scmp.eq.s32.totalorder %s18, 1
      %p83 = por %p81, %p82
      %p85 = scmp.ne.s32.totalorder %s70, %s84
      %p86 = scmp.eq.s32.totalorder %s18, 0
      %p87 = por %p85, %p86
      %s88 = ssub.s32 %s12, %s19
      %p89 = scmp.eq.s32.totalorder %s88, 0
      %s91 = sadd.s32 %s90, 1
      %s92 = scalar_select %p89, %s90, %s91
      %p95 = pneg %p89
      %p96 = scmp.eq.s32.totalorder %s12, 1
      %p97 = por %p95, %p96
      %p98 = scmp.ne.s32.totalorder %s90, %s93
      %p99 = scmp.eq.s32.totalorder %s12, 0
      %p100 = por %p98, %p99
      %p101 = scmp.ne.s32.totalorder %s90, %s93
      %p102 = scmp.eq.s32.totalorder %s17, 1
      %p103 = por %p101, %p102
      %p104 = scmp.ne.s32.totalorder %s93, %s94
      %p105 = scmp.eq.s32.totalorder %s17, 0
      %p106 = por %p104, %p105
      %p107 = scmp.ne.s32.totalorder %s93, %s94
      %p108 = scmp.eq.s32.totalorder %s18, 1
      %p109 = por %p107, %p108
      %p111 = scmp.ne.s32.totalorder %s94, %s110
      %p112 = scmp.eq.s32.totalorder %s18, 0
      %p113 = por %p111, %p112
      %p114 = scmp.le.s32.totalorder 1, %s12
      %p115 = scmp.lt.s32.totalorder %s12, 3
      %p116 = pnand %p114, %p115
      %p117 = pneg %p116
      // Predicated region
      $region9: #{base_hubert_forward.6} parent=5 // pred_check
        _
      $region10: #{base_hubert_forward.6} parent=5 // pred_check_branch
        %119 = sbr.rel (%p116) target = $region12
      $region11: #{base_hubert_forward.6} parent=5 // pred_region
        %s120 = ssub.s32 %s12, 1
        // Predicated region
        $region13: #{base_hubert_forward.6} parent=11 // pred_check
          %p121 = pneg %p59
        $region14: #{base_hubert_forward.6} parent=11 // pred_check_branch
          %123 = sbr.rel (%p121) target = $region16
        $region15: #{base_hubert_forward.6} parent=11 // pred_region
          _
        $region16: #{base_hubert_forward.6} parent=11 // pred_fallthru
          _
        // Predicated region
        $region17: #{base_hubert_forward.6} parent=11 // pred_check
          %p124 = pneg %p80
        $region18: #{base_hubert_forward.6} parent=11 // pred_check_branch
          %126 = sbr.rel (%p124) target = $region20
        $region19: #{base_hubert_forward.6} parent=11 // pred_region
          _
        $region20: #{base_hubert_forward.6} parent=11 // pred_fallthru
          _
      $region12: #{base_hubert_forward.6} parent=5 // pred_fallthru
        _
      %p127 = scmp.lt.s32.totalorder %s12, 2
      // Predicated region
      $region21: #{base_hubert_forward.6} parent=5 // pred_check
        %p128 = pneg %p127
      $region22: #{base_hubert_forward.6} parent=5 // pred_check_branch
        %130 = sbr.rel (%p128) target = $region24
      $region23: #{base_hubert_forward.6} parent=5 // pred_region
        // Predicated region
        $region25: #{base_hubert_forward.6} parent=23 // pred_check
          %p131 = pneg %p32
        $region26: #{base_hubert_forward.6} parent=23 // pred_check_branch
          %133 = sbr.rel (%p131) target = $region28
        $region27: #{base_hubert_forward.6} parent=23 // pred_region
          %p134 = scmp.lt.s32.totalorder %s12, 1
          %s135 = scalar_select %p134, %s12, 1
          %s136 = smul.addr %s135, 2
          %s137 = smul.addr %s136, 4
          %s138 = scalar_lea.vmem %s0, %s137
        $region28: #{base_hubert_forward.6} parent=23 // pred_fallthru
          _
      $region24: #{base_hubert_forward.6} parent=5 // pred_fallthru
        _
      %p139 = scmp.le.s32.totalorder 1, %s12
      %p140 = scmp.lt.s32.totalorder %s12, 3
      %p141 = pnand %p139, %p140
      %p142 = pneg %p141
      // Predicated region
      $region29: #{base_hubert_forward.6} parent=5 // pred_check
        _
      $region30: #{base_hubert_forward.6} parent=5 // pred_check_branch
        %144 = sbr.rel (%p141) target = $region32
      $region31: #{base_hubert_forward.6} parent=5 // pred_region
        %s145 = ssub.s32 %s12, 1
        %p146 = scmp.lt.s32.totalorder %s17, 1
        %s147 = scalar_select %p146, %s17, 1
        %s148 = smul.addr %s147, 2
        %s149 = smul.addr %s148, 4
        %s150 = scalar_lea.vmem %s0, %s149
        %p151 = pneg %p38
        %p152 = pneg %p35
        %p153 = pneg %p59
        %p154 = pneg %p56
        %p155 = pneg %p80
        %p156 = pneg %p77
        %p157 = pneg %p106
        %p158 = pneg %p103
        %s159 = sand.u32 %s93, 1
        %s160 = scalar_lea.sflag [#allocation3], %s159
        %s161 = sand.u32 %s93, 1
        %s162 = smul.addr %s161, 8
        %s163 = scalar_lea.vmem [#allocation2], %s162
        %p164 = scmp.lt.s32.totalorder %s17, 1
        %s165 = scalar_select %p164, %s17, 1
        %s166 = smul.addr %s165, 2
        %s167 = smul.addr %s166, 4
        %s168 = scalar_lea.vmem %s0, %s167
        %v170 = vld [vmem:[%s168] sm:$0xf]
        %v171 = vld [vmem:[%s168 + $0x4] sm:$0x1]
        %v172 = vld [vmem:[%s168] sm:$0xe]
        %v173 = vld [vmem:[%s1] sm:$0xf]
        %v174 = vld [vmem:[%s1 + $0x4] sm:$0xf]
        %v175 = vld [vmem:[%s1 + $0x8] sm:$0xf]
        %v176 = vld [vmem:[%s1 + $0xc] sm:$0xf]
        %v177 = vld [vmem:[%s1 + $0x10] sm:$0xf]
        %v178 = vld [vmem:[%s1 + $0x14] sm:$0xf]
        %s179 = scalar_lea.vmem %s1, 24
        %v180 = vld [vmem:[%s179] sm:$0xf]
        %v181 = vld [vmem:[%s179 + $0x4] sm:$0xf]
        %v182 = vld [vmem:[%s179 + $0x8] sm:$0xf]
        %v183 = vld [vmem:[%s179 + $0xc] sm:$0xf]
        %v184 = vld [vmem:[%s179 + $0x10] sm:$0xf]
        %v185 = vld [vmem:[%s179 + $0x14] sm:$0xf]
        %v188 = vunpack.c.l.b16 %v170
        %v189 = vunpack.c.l.b16 %v171
        %v190 = vpack.c.b16 %v189, %v188
        %v192 = vshrl.u32 %v190, 16
        %v194 = vshll.u32 %v190, 16
        %v196 = vrot.slane %v194, 1
        %v197 = vor.u32 %v192, %v196
        %v204 = vunpack.c.l.b16 %v180
        %v205 = vunpack.c.l.b16 %v181
        %v206 = vunpack.c.l.b16 %v182
        %v207 = vunpack.c.l.b16 %v183
        %v208 = vunpack.c.l.b16 %v184
        %v209 = vunpack.c.l.b16 %v185
        %v210 = vpack.c.b16 %v205, %v204
        %v211 = vpack.c.b16 %v207, %v206
        %v212 = vpack.c.b16 %v209, %v208
        %vm216 = vcmask 392192
        %v218 = vsel %vm216, %v197, 0
        %220 = vmatpush.bf16.msra.mxu0 0
        %221 = vmatpush.bf16.msra.mxu0 0
        %222 = vmatpush.bf16.msra.mxu0 0
        %223 = vmatpush.bf16.msra.mxu0 0
        %224 = vmatpush.bf16.msra.mxu0 0
        %225 = vmatpush.bf16.msra.mxu0 %v212
        %226 = vmatpush.bf16.msra.mxu0 %v211
        %227 = vmatpush.bf16.msra.mxu0 %v210
        %228 = vmatmul.bf16.gmra.mxu0 %v218
        %v229 = vpop.f32.mrf.mxu0
        %v230 = vadd.f32 0.0, %v229
        %v231 = vpop.f32.mrf.mxu0
        %232 = vdwg.mxu0
        %v239 = vunpack.c.l.b16 %v173
        %v240 = vunpack.c.l.b16 %v174
        %v241 = vunpack.c.l.b16 %v175
        %v242 = vunpack.c.l.b16 %v176
        %v243 = vunpack.c.l.b16 %v177
        %v244 = vunpack.c.l.b16 %v178
        %v245 = vpack.c.b16 %v240, %v239
        %v246 = vpack.c.b16 %v242, %v241
        %v247 = vpack.c.b16 %v244, %v243
        %v252 = vsel %vm216, %v170, 0
        %254 = vmatpush.bf16.msra.mxu0 0
        %255 = vmatpush.bf16.msra.mxu0 0
        %256 = vmatpush.bf16.msra.mxu0 0
        %257 = vmatpush.bf16.msra.mxu0 0
        %258 = vmatpush.bf16.msra.mxu0 0
        %259 = vmatpush.bf16.msra.mxu0 %v247
        %260 = vmatpush.bf16.msra.mxu0 %v246
        %261 = vmatpush.bf16.msra.mxu0 %v245
        %262 = vmatmul.bf16.gmra.mxu0 %v252
        %v263 = vpop.f32.mrf.mxu0
        %v264 = vadd.f32 %v230, %v263
        %v265 = vpop.f32.mrf.mxu0
        %266 = vdwg.mxu0
        %s267 = scalar_lea.vmem %s1, 48
        %v268 = vld [vmem:[%s267] sm:$0xf]
        %v269 = vld [vmem:[%s267 + $0x4] sm:$0xf]
        %v270 = vld [vmem:[%s267 + $0x8] sm:$0xf]
        %v271 = vld [vmem:[%s267 + $0xc] sm:$0xf]
        %v272 = vld [vmem:[%s267 + $0x10] sm:$0xf]
        %v273 = vld [vmem:[%s267 + $0x14] sm:$0xf]
        %v275 = vunpack.c.l.b16 %v172
        %v276 = vpack.c.b16 %v189, %v275
        %v277 = vrot.slane %v276, 1
        %v284 = vunpack.c.l.b16 %v268
        %v285 = vunpack.c.l.b16 %v269
        %v286 = vunpack.c.l.b16 %v270
        %v287 = vunpack.c.l.b16 %v271
        %v288 = vunpack.c.l.b16 %v272
        %v289 = vunpack.c.l.b16 %v273
        %v290 = vpack.c.b16 %v285, %v284
        %v291 = vpack.c.b16 %v287, %v286
        %v292 = vpack.c.b16 %v289, %v288
        %v297 = vsel %vm216, %v277, 0
        %299 = vmatpush.bf16.msra.mxu0 0
        %300 = vmatpush.bf16.msra.mxu0 0
        %301 = vmatpush.bf16.msra.mxu0 0
        %302 = vmatpush.bf16.msra.mxu0 0
        %303 = vmatpush.bf16.msra.mxu0 0
        %304 = vmatpush.bf16.msra.mxu0 %v292
        %305 = vmatpush.bf16.msra.mxu0 %v291
        %306 = vmatpush.bf16.msra.mxu0 %v290
        %307 = vmatmul.bf16.gmra.mxu0 %v297
        %v308 = vpop.f32.mrf.mxu0
        %v309 = vadd.f32 0.0, %v308
        %v310 = vpop.f32.mrf.mxu0
        %311 = vdwg.mxu0
        %v312 = vadd.f32 %v264, %v309
        %v313 = vld [vmem:[%s2] sm:$0x1]
        %v315 = vperm.slane %v313, 0
        %v317 = vadd.f32 %v312, %v315
        %vm318 = vcmask 162816
        %319 = vst.msk [vmem:[%s163] sm:$0xff] %vm318, %v317
        %s320 = sand.u32 %s93, 1
        %s321 = scalar_lea.sflag [#allocation3], %s320
        %s322 = sand.u32 %s93, 1
        %s323 = smul.addr %s322, 8
        %s324 = scalar_lea.vmem [#allocation2], %s323
        // Predicated region
        $region33: #{base_hubert_forward.6} parent=31 // pred_check
          %p325 = pneg %p103
        $region34: #{base_hubert_forward.6} parent=31 // pred_check_branch
          %327 = sbr.rel (%p325) target = $region36
        $region35: #{base_hubert_forward.6} parent=31 // pred_region
          %329 = vsyncadd %s321, 0
          %s330 = smul.addr %s17, 8
          %s331 = scalar_lea.hbm %s3, %s330
          %s333 = sshll.u32 %s324, 4
          %s334 = int_to_ptr.vmem [resolvable:$true] %s333
          %s335 = sshll.u32 %s331, 4
          %s336 = int_to_ptr.hbm [resolvable:$true] %s335
          %338 = dma.vmem_to_hbm [thread:$0]  %s334, 128, %s336, %s321
        $region36: #{base_hubert_forward.6} parent=31 // pred_fallthru
          _
      $region32: #{base_hubert_forward.6} parent=5 // pred_fallthru
        _
      %p339 = scmp.le.s32.totalorder 2, %s12
      // Predicated region
      $region37: #{base_hubert_forward.6} parent=5 // pred_check
        %p340 = pneg %p339
      $region38: #{base_hubert_forward.6} parent=5 // pred_check_branch
        %342 = sbr.rel (%p340) target = $region40
      $region39: #{base_hubert_forward.6} parent=5 // pred_region
        %s343 = ssub.s32 %s12, 2
        // Predicated region
        $region41: #{base_hubert_forward.6} parent=39 // pred_check
          %p344 = pneg %p109
        $region42: #{base_hubert_forward.6} parent=39 // pred_check_branch
          %346 = sbr.rel (%p344) target = $region44
        $region43: #{base_hubert_forward.6} parent=39 // pred_region
          %s347 = sand.u32 %s94, 1
          %s348 = scalar_lea.sflag [#allocation3], %s347
          %s349 = sand.u32 %s94, 1
          %s350 = smul.addr %s349, 8
          %s351 = scalar_lea.vmem [#allocation2], %s350
          %353 = dma.done %s348, 128
        $region44: #{base_hubert_forward.6} parent=39 // pred_fallthru
          _
      $region40: #{base_hubert_forward.6} parent=5 // pred_fallthru
        _
    $region6: #{base_hubert_forward.6} parent=1 // loop_footer
      %s16 = sadd.s32 1, %s12
    $region7: #{base_hubert_forward.6} parent=1 // loop_footer_branch
      %11 = sbr.rel target = $region3
    $region8: #{base_hubert_forward.6} parent=1 // loop_exit
      _
    %354 = vsyncpa [#allocation3], 1
    %s355 = scalar_lea.sflag [#allocation3], 1
    %356 = vsyncpa %s355, 1

</llo_original>
